<compile_context>
chip_gen: v7x
topology: tpu7x:2x2x1
jax: 0.10.0
libtpu: 0.0.40
codegen_flags: <defaults>
</compile_context>

<pallas_src>
import functools

import jax
import jax.numpy as jnp
from jax.experimental import pallas as pl
from jax.experimental.pallas import tpu as pltpu


# ----------------------------- config -----------------------------
class Config:
    n_embed = 100
    d_embed = 32
    d_proj = 32
    d_hidden = 32
    n_layers = 1
    birnn = False
    projection = True
    fix_emb = True
    dp_ratio = 0.0
    d_out = 4
    n_cells = n_layers * (2 if birnn else 1)


PAD_OUT = 128  # lane-dense padded width for the final Linear
_VMEM = pl.BlockSpec(memory_space=pltpu.MemorySpace.VMEM)


# ------------------------- fused Pallas kernel --------------------------
def _snli_fused_kernel(T, B, H, use_projection,
                       ids_ref, embed_ref, proj_w_ref, proj_b_ref,
                       wih_ref, whh_ref, lstm_b_ref,
                       w1_ref, b1_ref, w2_ref, b2_ref, w3_ref, b3_ref,
                       w4_ref, b4_ref, o_ref):
    nb = 2 * B                      # premise + hypothesis batched together
    n_rows = T * nb
    vocab = embed_ref.shape[0]

    # ---- embedding lookup as one-hot matmul (table resident in VMEM) ----
    ids = ids_ref[...]                                            # (n_rows, 1) int32
    onehot = (jax.lax.broadcasted_iota(jnp.int32, (n_rows, vocab), 1)
              == ids).astype(jnp.float32)                         # (n_rows, vocab)
    x = jnp.dot(onehot, embed_ref[...],
                preferred_element_type=jnp.float32)               # (n_rows, d_embed)
    # fix_emb => detach: no-op in a pure forward pass.

    # ---- Bottle(Linear) projection + ReLU (dropout p=0 == identity) ----
    if use_projection:
        x = jnp.maximum(
            jnp.dot(x, proj_w_ref[...], preferred_element_type=jnp.float32)
            + proj_b_ref[...], 0.0)                               # (n_rows, d_proj)

    # ---- LSTM encoder: hoist input-to-hidden matmul out of the loop ----
    xg = jnp.dot(x, wih_ref[...],
                 preferred_element_type=jnp.float32) + lstm_b_ref[...]  # (n_rows, 4H)
    whh = whh_ref[...]                                            # (H, 4H)

    h = jnp.zeros((nb, H), jnp.float32)
    c = jnp.zeros((nb, H), jnp.float32)
    for t in range(T):                                            # fully unrolled, T=8
        gates = xg[t * nb:(t + 1) * nb, :] + jnp.dot(
            h, whh, preferred_element_type=jnp.float32)           # (nb, 4H)
        sg = jax.nn.sigmoid(gates)                                # one full-vreg EUP pass
        g = jnp.tanh(gates[:, 2 * H:3 * H])
        c = sg[:, H:2 * H] * c + sg[:, 0:H] * g                   # f*c + i*g
        h = sg[:, 3 * H:4 * H] * jnp.tanh(c)                      # o*tanh(c)

    # ---- torch.cat([premise_enc, hypothesis_enc], dim=1) ----
    cat = jnp.concatenate([h[:B, :], h[B:nb, :]], axis=1)         # (B, 2H)

    # ---- out MLP: 3x (Linear + ReLU) + Linear (padded to 128 lanes) ----
    y = jnp.maximum(jnp.dot(cat, w1_ref[...], preferred_element_type=jnp.float32)
                    + b1_ref[...], 0.0)
    y = jnp.maximum(jnp.dot(y, w2_ref[...], preferred_element_type=jnp.float32)
                    + b2_ref[...], 0.0)
    y = jnp.maximum(jnp.dot(y, w3_ref[...], preferred_element_type=jnp.float32)
                    + b3_ref[...], 0.0)
    o_ref[...] = jnp.dot(y, w4_ref[...], preferred_element_type=jnp.float32) + b4_ref[...]


# ----------------------- parameter initialization -----------------------
def init_params(cfg, key):
    ks = list(jax.random.split(key, 16))

    def nrm(k, shape, scale=0.1):
        return (scale * jax.random.normal(k, shape)).astype(jnp.float32)

    p = {}
    p["embed"] = nrm(ks[0], (cfg.n_embed, cfg.d_embed), 1.0)
    # projection Linear(d_embed, d_proj): stored (in, out)
    p["proj_w"] = nrm(ks[1], (cfg.d_embed, cfg.d_proj))
    p["proj_b"] = nrm(ks[2], (cfg.d_proj,))
    # LSTM layer 0 (unidirectional): W_ih (D,4H), W_hh (H,4H), combined bias b_ih+b_hh
    H = cfg.d_hidden
    p["lstm_wih"] = nrm(ks[3], (cfg.d_proj, 4 * H))
    p["lstm_whh"] = nrm(ks[4], (H, 4 * H))
    p["lstm_b"] = nrm(ks[5], (4 * H,))
    # output MLP
    s = 2 * cfg.d_hidden * (2 if cfg.birnn else 1)
    p["o_w1"], p["o_b1"] = nrm(ks[6], (s, s)), nrm(ks[7], (s,))
    p["o_w2"], p["o_b2"] = nrm(ks[8], (s, s)), nrm(ks[9], (s,))
    p["o_w3"], p["o_b3"] = nrm(ks[10], (s, s)), nrm(ks[11], (s,))
    p["o_w4"], p["o_b4"] = nrm(ks[12], (s, cfg.d_out)), nrm(ks[13], (cfg.d_out,))
    # lane-dense padded final layer (built once; zero-padded columns => exact result)
    p["o_w4_pad"] = jnp.zeros((s, PAD_OUT), jnp.float32).at[:, :cfg.d_out].set(p["o_w4"])
    p["o_b4_pad"] = jnp.zeros((PAD_OUT,), jnp.float32).at[:cfg.d_out].set(p["o_b4"])
    return p


# ----------------------------- forward -----------------------------
def snli_forward(cfg, params, premise, hypothesis):
    T, B = premise.shape
    H = cfg.d_hidden

    # Stack premise/hypothesis along the batch dim so one LSTM loop encodes both.
    ids = jnp.concatenate([premise, hypothesis], axis=1)          # (T, 2B)
    ids = ids.reshape(T * 2 * B, 1).astype(jnp.int32)             # row = t*2B + b

    kernel = functools.partial(_snli_fused_kernel, T, B, H, cfg.projection)
    out_pad = pl.pallas_call(
        kernel,
        out_shape=jax.ShapeDtypeStruct((B, PAD_OUT), jnp.float32),
        in_specs=[_VMEM] * 15,
        out_specs=_VMEM,
    )(ids,
      params["embed"],
      params["proj_w"], params["proj_b"].reshape(1, -1),
      params["lstm_wih"], params["lstm_whh"], params["lstm_b"].reshape(1, -1),
      params["o_w1"], params["o_b1"].reshape(1, -1),
      params["o_w2"], params["o_b2"].reshape(1, -1),
      params["o_w3"], params["o_b3"].reshape(1, -1),
      params["o_w4_pad"], params["o_b4_pad"].reshape(1, -1))
    return out_pad[:, :cfg.d_out]                                 # (B, d_out)


# ------------------------- pure-JAX reference -------------------------
def snli_reference(cfg, params, premise, hypothesis):
    T, B = premise.shape
    H = cfg.d_hidden

    def project(x):
        y = x.reshape(T * B, cfg.d_embed) @ params["proj_w"] + params["proj_b"]
        return jnp.maximum(y, 0.0).reshape(T, B, cfg.d_proj)

    def lstm(x):
        h = jnp.zeros((B, H), jnp.float32)
        c = jnp.zeros((B, H), jnp.float32)
        for t in range(T):
            g = x[t] @ params["lstm_wih"] + h @ params["lstm_whh"] + params["lstm_b"]
            i, f, gg, o = (jax.nn.sigmoid(g[:, :H]), jax.nn.sigmoid(g[:, H:2 * H]),
                           jnp.tanh(g[:, 2 * H:3 * H]), jax.nn.sigmoid(g[:, 3 * H:]))
            c = f * c + i * gg
            h = o * jnp.tanh(c)
        return h

    pe = jnp.take(params["embed"], premise, axis=0)
    he = jnp.take(params["embed"], hypothesis, axis=0)
    if cfg.projection:
        pe, he = project(pe), project(he)
    x = jnp.concatenate([lstm(pe), lstm(he)], axis=1)
    for wk, bk in (("o_w1", "o_b1"), ("o_w2", "o_b2"), ("o_w3", "o_b3")):
        x = jnp.maximum(x @ params[wk] + params[bk], 0.0)
    return x @ params["o_w4"] + params["o_b4"]


# ------------------------------- main -------------------------------
if __name__ == "__main__":
    cfg = Config()
    key = jax.random.PRNGKey(0)
    kp, kh, kw = jax.random.split(key, 3)

    T, B = 8, 2  # seq_len, batch (time-major)
    premise = jax.random.randint(kp, (T, B), 0, cfg.n_embed, dtype=jnp.int32)
    hypothesis = jax.random.randint(kh, (T, B), 0, cfg.n_embed, dtype=jnp.int32)

    params = init_params(cfg, kw)

    fwd = jax.jit(functools.partial(snli_forward, cfg))
    scores = fwd(params, premise, hypothesis)
    scores = jax.block_until_ready(scores)

    ref = snli_reference(cfg, params, premise, hypothesis)
    assert scores.shape == (B, cfg.d_out)
    assert jnp.allclose(scores, ref, atol=1e-4, rtol=1e-4), (scores, ref)

    print("KERNEL_OK")
</pallas_src>

<mosaic_0001>
module attributes {stable_mosaic.version = 11 : i64} {
  func.func @_snli_fused_kernel(%arg0: memref<32x1xi32, #tpu.memory_space<vmem>>, %arg1: memref<100x32xf32, #tpu.memory_space<vmem>>, %arg2: memref<32x32xf32, #tpu.memory_space<vmem>>, %arg3: memref<1x32xf32, #tpu.memory_space<vmem>>, %arg4: memref<32x128xf32, #tpu.memory_space<vmem>>, %arg5: memref<32x128xf32, #tpu.memory_space<vmem>>, %arg6: memref<1x128xf32, #tpu.memory_space<vmem>>, %arg7: memref<64x64xf32, #tpu.memory_space<vmem>>, %arg8: memref<1x64xf32, #tpu.memory_space<vmem>>, %arg9: memref<64x64xf32, #tpu.memory_space<vmem>>, %arg10: memref<1x64xf32, #tpu.memory_space<vmem>>, %arg11: memref<64x64xf32, #tpu.memory_space<vmem>>, %arg12: memref<1x64xf32, #tpu.memory_space<vmem>>, %arg13: memref<64x128xf32, #tpu.memory_space<vmem>>, %arg14: memref<1x128xf32, #tpu.memory_space<vmem>>, %arg15: memref<2x128xf32, #tpu.memory_space<vmem>>) attributes {dimension_semantics = [], scalar_prefetch = 0 : i64, scratch_operands = 0 : i64, tpu.core_type = #tpu.core_type<tc>} {
    %c0 = arith.constant 0 : index
    %c0_0 = arith.constant 0 : index
    %0 = vector.load %arg0[%c0, %c0_0] : memref<32x1xi32, #tpu.memory_space<vmem>>, vector<32x1xi32>
    %1 = tpu.iota {dimensions = array<i32: 1>} : vector<32x100xi32>
    %2 = vector.broadcast %0 : vector<32x1xi32> to vector<32x100xi32>
    %3 = arith.cmpi eq, %1, %2 : vector<32x100xi32>
    %4 = arith.extui %3 : vector<32x100xi1> to vector<32x100xi32>
    %5 = arith.sitofp %4 : vector<32x100xi32> to vector<32x100xf32>
    %c0_1 = arith.constant 0 : index
    %c0_2 = arith.constant 0 : index
    %6 = vector.load %arg1[%c0_1, %c0_2] : memref<100x32xf32, #tpu.memory_space<vmem>>, vector<100x32xf32>
    %cst = arith.constant dense<0.000000e+00> : vector<32x32xf32>
    %7 = tpu.matmul %5, %6, %cst {dimension_numbers = #tpu.dot_dimension_numbers<[1], [0], [0], [1], [0, 0, 1, 1], [], []>} : vector<32x100xf32>, vector<100x32xf32>, vector<32x32xf32> -> vector<32x32xf32>
    %c0_3 = arith.constant 0 : index
    %c0_4 = arith.constant 0 : index
    %8 = vector.load %arg2[%c0_3, %c0_4] : memref<32x32xf32, #tpu.memory_space<vmem>>, vector<32x32xf32>
    %cst_5 = arith.constant dense<0.000000e+00> : vector<32x32xf32>
    %9 = tpu.matmul %7, %8, %cst_5 {dimension_numbers = #tpu.dot_dimension_numbers<[1], [0], [0], [1], [0, 0, 1, 1], [], []>} : vector<32x32xf32>, vector<32x32xf32>, vector<32x32xf32> -> vector<32x32xf32>
    %c0_6 = arith.constant 0 : index
    %c0_7 = arith.constant 0 : index
    %10 = vector.load %arg3[%c0_6, %c0_7] : memref<1x32xf32, #tpu.memory_space<vmem>>, vector<1x32xf32>
    %11 = vector.broadcast %10 : vector<1x32xf32> to vector<32x32xf32>
    %12 = arith.addf %9, %11 : vector<32x32xf32>
    %cst_8 = arith.constant 0.000000e+00 : f32
    %13 = vector.broadcast %cst_8 : f32 to vector<32x32xf32>
    %14 = arith.maximumf %12, %13 : vector<32x32xf32>
    %c0_9 = arith.constant 0 : index
    %c0_10 = arith.constant 0 : index
    %15 = vector.load %arg4[%c0_9, %c0_10] : memref<32x128xf32, #tpu.memory_space<vmem>>, vector<32x128xf32>
    %cst_11 = arith.constant dense<0.000000e+00> : vector<32x128xf32>
    %16 = tpu.matmul %14, %15, %cst_11 {dimension_numbers = #tpu.dot_dimension_numbers<[1], [0], [0], [1], [0, 0, 1, 1], [], []>} : vector<32x32xf32>, vector<32x128xf32>, vector<32x128xf32> -> vector<32x128xf32>
    %c0_12 = arith.constant 0 : index
    %c0_13 = arith.constant 0 : index
    %17 = vector.load %arg6[%c0_12, %c0_13] : memref<1x128xf32, #tpu.memory_space<vmem>>, vector<1x128xf32>
    %18 = vector.broadcast %17 : vector<1x128xf32> to vector<32x128xf32>
    %19 = arith.addf %16, %18 : vector<32x128xf32>
    %c0_14 = arith.constant 0 : index
    %c0_15 = arith.constant 0 : index
    %20 = vector.load %arg5[%c0_14, %c0_15] : memref<32x128xf32, #tpu.memory_space<vmem>>, vector<32x128xf32>
    %cst_16 = arith.constant 0.000000e+00 : f32
    %21 = vector.broadcast %cst_16 : f32 to vector<4x32xf32>
    %cst_17 = arith.constant 0.000000e+00 : f32
    %22 = vector.broadcast %cst_17 : f32 to vector<4x32xf32>
    %23 = vector.extract_strided_slice %19 {offsets = [0, 0], sizes = [4, 128], strides = [1, 1]} : vector<32x128xf32> to vector<4x128xf32>
    %cst_18 = arith.constant dense<0.000000e+00> : vector<4x128xf32>
    %24 = tpu.matmul %21, %20, %cst_18 {dimension_numbers = #tpu.dot_dimension_numbers<[1], [0], [0], [1], [0, 0, 1, 1], [], []>} : vector<4x32xf32>, vector<32x128xf32>, vector<4x128xf32> -> vector<4x128xf32>
    %25 = arith.addf %23, %24 : vector<4x128xf32>
    %26 = arith.negf %25 : vector<4x128xf32>
    %27 = math.exp %26 : vector<4x128xf32>
    %cst_19 = arith.constant 1.000000e+00 : f32
    %28 = vector.broadcast %cst_19 : f32 to vector<4x128xf32>
    %29 = arith.addf %28, %27 : vector<4x128xf32>
    %30 = arith.divf %28, %29 : vector<4x128xf32>
    %31 = vector.extract_strided_slice %25 {offsets = [0, 64], sizes = [4, 32], strides = [1, 1]} : vector<4x128xf32> to vector<4x32xf32>
    %32 = math.tanh %31 : vector<4x32xf32>
    %33 = vector.extract_strided_slice %30 {offsets = [0, 32], sizes = [4, 32], strides = [1, 1]} : vector<4x128xf32> to vector<4x32xf32>
    %34 = arith.mulf %33, %22 : vector<4x32xf32>
    %35 = vector.extract_strided_slice %30 {offsets = [0, 0], sizes = [4, 32], strides = [1, 1]} : vector<4x128xf32> to vector<4x32xf32>
    %36 = arith.mulf %35, %32 : vector<4x32xf32>
    %37 = arith.addf %34, %36 : vector<4x32xf32>
    %38 = vector.extract_strided_slice %30 {offsets = [0, 96], sizes = [4, 32], strides = [1, 1]} : vector<4x128xf32> to vector<4x32xf32>
    %39 = math.tanh %37 : vector<4x32xf32>
    %40 = arith.mulf %38, %39 : vector<4x32xf32>
    %41 = vector.extract_strided_slice %19 {offsets = [4, 0], sizes = [4, 128], strides = [1, 1]} : vector<32x128xf32> to vector<4x128xf32>
    %cst_20 = arith.constant dense<0.000000e+00> : vector<4x128xf32>
    %42 = tpu.matmul %40, %20, %cst_20 {dimension_numbers = #tpu.dot_dimension_numbers<[1], [0], [0], [1], [0, 0, 1, 1], [], []>} : vector<4x32xf32>, vector<32x128xf32>, vector<4x128xf32> -> vector<4x128xf32>
    %43 = arith.addf %41, %42 : vector<4x128xf32>
    %44 = arith.negf %43 : vector<4x128xf32>
    %45 = math.exp %44 : vector<4x128xf32>
    %cst_21 = arith.constant 1.000000e+00 : f32
    %46 = vector.broadcast %cst_21 : f32 to vector<4x128xf32>
    %47 = arith.addf %46, %45 : vector<4x128xf32>
    %48 = arith.divf %46, %47 : vector<4x128xf32>
    %49 = vector.extract_strided_slice %43 {offsets = [0, 64], sizes = [4, 32], strides = [1, 1]} : vector<4x128xf32> to vector<4x32xf32>
    %50 = math.tanh %49 : vector<4x32xf32>
    %51 = vector.extract_strided_slice %48 {offsets = [0, 32], sizes = [4, 32], strides = [1, 1]} : vector<4x128xf32> to vector<4x32xf32>
    %52 = arith.mulf %51, %37 : vector<4x32xf32>
    %53 = vector.extract_strided_slice %48 {offsets = [0, 0], sizes = [4, 32], strides = [1, 1]} : vector<4x128xf32> to vector<4x32xf32>
    %54 = arith.mulf %53, %50 : vector<4x32xf32>
    %55 = arith.addf %52, %54 : vector<4x32xf32>
    %56 = vector.extract_strided_slice %48 {offsets = [0, 96], sizes = [4, 32], strides = [1, 1]} : vector<4x128xf32> to vector<4x32xf32>
    %57 = math.tanh %55 : vector<4x32xf32>
    %58 = arith.mulf %56, %57 : vector<4x32xf32>
    %59 = vector.extract_strided_slice %19 {offsets = [8, 0], sizes = [4, 128], strides = [1, 1]} : vector<32x128xf32> to vector<4x128xf32>
    %cst_22 = arith.constant dense<0.000000e+00> : vector<4x128xf32>
    %60 = tpu.matmul %58, %20, %cst_22 {dimension_numbers = #tpu.dot_dimension_numbers<[1], [0], [0], [1], [0, 0, 1, 1], [], []>} : vector<4x32xf32>, vector<32x128xf32>, vector<4x128xf32> -> vector<4x128xf32>
    %61 = arith.addf %59, %60 : vector<4x128xf32>
    %62 = arith.negf %61 : vector<4x128xf32>
    %63 = math.exp %62 : vector<4x128xf32>
    %cst_23 = arith.constant 1.000000e+00 : f32
    %64 = vector.broadcast %cst_23 : f32 to vector<4x128xf32>
    %65 = arith.addf %64, %63 : vector<4x128xf32>
    %66 = arith.divf %64, %65 : vector<4x128xf32>
    %67 = vector.extract_strided_slice %61 {offsets = [0, 64], sizes = [4, 32], strides = [1, 1]} : vector<4x128xf32> to vector<4x32xf32>
    %68 = math.tanh %67 : vector<4x32xf32>
    %69 = vector.extract_strided_slice %66 {offsets = [0, 32], sizes = [4, 32], strides = [1, 1]} : vector<4x128xf32> to vector<4x32xf32>
    %70 = arith.mulf %69, %55 : vector<4x32xf32>
    %71 = vector.extract_strided_slice %66 {offsets = [0, 0], sizes = [4, 32], strides = [1, 1]} : vector<4x128xf32> to vector<4x32xf32>
    %72 = arith.mulf %71, %68 : vector<4x32xf32>
    %73 = arith.addf %70, %72 : vector<4x32xf32>
    %74 = vector.extract_strided_slice %66 {offsets = [0, 96], sizes = [4, 32], strides = [1, 1]} : vector<4x128xf32> to vector<4x32xf32>
    %75 = math.tanh %73 : vector<4x32xf32>
    %76 = arith.mulf %74, %75 : vector<4x32xf32>
    %77 = vector.extract_strided_slice %19 {offsets = [12, 0], sizes = [4, 128], strides = [1, 1]} : vector<32x128xf32> to vector<4x128xf32>
    %cst_24 = arith.constant dense<0.000000e+00> : vector<4x128xf32>
    %78 = tpu.matmul %76, %20, %cst_24 {dimension_numbers = #tpu.dot_dimension_numbers<[1], [0], [0], [1], [0, 0, 1, 1], [], []>} : vector<4x32xf32>, vector<32x128xf32>, vector<4x128xf32> -> vector<4x128xf32>
    %79 = arith.addf %77, %78 : vector<4x128xf32>
    %80 = arith.negf %79 : vector<4x128xf32>
    %81 = math.exp %80 : vector<4x128xf32>
    %cst_25 = arith.constant 1.000000e+00 : f32
    %82 = vector.broadcast %cst_25 : f32 to vector<4x128xf32>
    %83 = arith.addf %82, %81 : vector<4x128xf32>
    %84 = arith.divf %82, %83 : vector<4x128xf32>
    %85 = vector.extract_strided_slice %79 {offsets = [0, 64], sizes = [4, 32], strides = [1, 1]} : vector<4x128xf32> to vector<4x32xf32>
    %86 = math.tanh %85 : vector<4x32xf32>
    %87 = vector.extract_strided_slice %84 {offsets = [0, 32], sizes = [4, 32], strides = [1, 1]} : vector<4x128xf32> to vector<4x32xf32>
    %88 = arith.mulf %87, %73 : vector<4x32xf32>
    %89 = vector.extract_strided_slice %84 {offsets = [0, 0], sizes = [4, 32], strides = [1, 1]} : vector<4x128xf32> to vector<4x32xf32>
    %90 = arith.mulf %89, %86 : vector<4x32xf32>
    %91 = arith.addf %88, %90 : vector<4x32xf32>
    %92 = vector.extract_strided_slice %84 {offsets = [0, 96], sizes = [4, 32], strides = [1, 1]} : vector<4x128xf32> to vector<4x32xf32>
    %93 = math.tanh %91 : vector<4x32xf32>
    %94 = arith.mulf %92, %93 : vector<4x32xf32>
    %95 = vector.extract_strided_slice %19 {offsets = [16, 0], sizes = [4, 128], strides = [1, 1]} : vector<32x128xf32> to vector<4x128xf32>
    %cst_26 = arith.constant dense<0.000000e+00> : vector<4x128xf32>
    %96 = tpu.matmul %94, %20, %cst_26 {dimension_numbers = #tpu.dot_dimension_numbers<[1], [0], [0], [1], [0, 0, 1, 1], [], []>} : vector<4x32xf32>, vector<32x128xf32>, vector<4x128xf32> -> vector<4x128xf32>
    %97 = arith.addf %95, %96 : vector<4x128xf32>
    %98 = arith.negf %97 : vector<4x128xf32>
    %99 = math.exp %98 : vector<4x128xf32>
    %cst_27 = arith.constant 1.000000e+00 : f32
    %100 = vector.broadcast %cst_27 : f32 to vector<4x128xf32>
    %101 = arith.addf %100, %99 : vector<4x128xf32>
    %102 = arith.divf %100, %101 : vector<4x128xf32>
    %103 = vector.extract_strided_slice %97 {offsets = [0, 64], sizes = [4, 32], strides = [1, 1]} : vector<4x128xf32> to vector<4x32xf32>
    %104 = math.tanh %103 : vector<4x32xf32>
    %105 = vector.extract_strided_slice %102 {offsets = [0, 32], sizes = [4, 32], strides = [1, 1]} : vector<4x128xf32> to vector<4x32xf32>
    %106 = arith.mulf %105, %91 : vector<4x32xf32>
    %107 = vector.extract_strided_slice %102 {offsets = [0, 0], sizes = [4, 32], strides = [1, 1]} : vector<4x128xf32> to vector<4x32xf32>
    %108 = arith.mulf %107, %104 : vector<4x32xf32>
    %109 = arith.addf %106, %108 : vector<4x32xf32>
    %110 = vector.extract_strided_slice %102 {offsets = [0, 96], sizes = [4, 32], strides = [1, 1]} : vector<4x128xf32> to vector<4x32xf32>
    %111 = math.tanh %109 : vector<4x32xf32>
    %112 = arith.mulf %110, %111 : vector<4x32xf32>
    %113 = vector.extract_strided_slice %19 {offsets = [20, 0], sizes = [4, 128], strides = [1, 1]} : vector<32x128xf32> to vector<4x128xf32>
    %cst_28 = arith.constant dense<0.000000e+00> : vector<4x128xf32>
    %114 = tpu.matmul %112, %20, %cst_28 {dimension_numbers = #tpu.dot_dimension_numbers<[1], [0], [0], [1], [0, 0, 1, 1], [], []>} : vector<4x32xf32>, vector<32x128xf32>, vector<4x128xf32> -> vector<4x128xf32>
    %115 = arith.addf %113, %114 : vector<4x128xf32>
    %116 = arith.negf %115 : vector<4x128xf32>
    %117 = math.exp %116 : vector<4x128xf32>
    %cst_29 = arith.constant 1.000000e+00 : f32
    %118 = vector.broadcast %cst_29 : f32 to vector<4x128xf32>
    %119 = arith.addf %118, %117 : vector<4x128xf32>
    %120 = arith.divf %118, %119 : vector<4x128xf32>
    %121 = vector.extract_strided_slice %115 {offsets = [0, 64], sizes = [4, 32], strides = [1, 1]} : vector<4x128xf32> to vector<4x32xf32>
    %122 = math.tanh %121 : vector<4x32xf32>
    %123 = vector.extract_strided_slice %120 {offsets = [0, 32], sizes = [4, 32], strides = [1, 1]} : vector<4x128xf32> to vector<4x32xf32>
    %124 = arith.mulf %123, %109 : vector<4x32xf32>
    %125 = vector.extract_strided_slice %120 {offsets = [0, 0], sizes = [4, 32], strides = [1, 1]} : vector<4x128xf32> to vector<4x32xf32>
    %126 = arith.mulf %125, %122 : vector<4x32xf32>
    %127 = arith.addf %124, %126 : vector<4x32xf32>
    %128 = vector.extract_strided_slice %120 {offsets = [0, 96], sizes = [4, 32], strides = [1, 1]} : vector<4x128xf32> to vector<4x32xf32>
    %129 = math.tanh %127 : vector<4x32xf32>
    %130 = arith.mulf %128, %129 : vector<4x32xf32>
    %131 = vector.extract_strided_slice %19 {offsets = [24, 0], sizes = [4, 128], strides = [1, 1]} : vector<32x128xf32> to vector<4x128xf32>
    %cst_30 = arith.constant dense<0.000000e+00> : vector<4x128xf32>
    %132 = tpu.matmul %130, %20, %cst_30 {dimension_numbers = #tpu.dot_dimension_numbers<[1], [0], [0], [1], [0, 0, 1, 1], [], []>} : vector<4x32xf32>, vector<32x128xf32>, vector<4x128xf32> -> vector<4x128xf32>
    %133 = arith.addf %131, %132 : vector<4x128xf32>
    %134 = arith.negf %133 : vector<4x128xf32>
    %135 = math.exp %134 : vector<4x128xf32>
    %cst_31 = arith.constant 1.000000e+00 : f32
    %136 = vector.broadcast %cst_31 : f32 to vector<4x128xf32>
    %137 = arith.addf %136, %135 : vector<4x128xf32>
    %138 = arith.divf %136, %137 : vector<4x128xf32>
    %139 = vector.extract_strided_slice %133 {offsets = [0, 64], sizes = [4, 32], strides = [1, 1]} : vector<4x128xf32> to vector<4x32xf32>
    %140 = math.tanh %139 : vector<4x32xf32>
    %141 = vector.extract_strided_slice %138 {offsets = [0, 32], sizes = [4, 32], strides = [1, 1]} : vector<4x128xf32> to vector<4x32xf32>
    %142 = arith.mulf %141, %127 : vector<4x32xf32>
    %143 = vector.extract_strided_slice %138 {offsets = [0, 0], sizes = [4, 32], strides = [1, 1]} : vector<4x128xf32> to vector<4x32xf32>
    %144 = arith.mulf %143, %140 : vector<4x32xf32>
    %145 = arith.addf %142, %144 : vector<4x32xf32>
    %146 = vector.extract_strided_slice %138 {offsets = [0, 96], sizes = [4, 32], strides = [1, 1]} : vector<4x128xf32> to vector<4x32xf32>
    %147 = math.tanh %145 : vector<4x32xf32>
    %148 = arith.mulf %146, %147 : vector<4x32xf32>
    %149 = vector.extract_strided_slice %19 {offsets = [28, 0], sizes = [4, 128], strides = [1, 1]} : vector<32x128xf32> to vector<4x128xf32>
    %cst_32 = arith.constant dense<0.000000e+00> : vector<4x128xf32>
    %150 = tpu.matmul %148, %20, %cst_32 {dimension_numbers = #tpu.dot_dimension_numbers<[1], [0], [0], [1], [0, 0, 1, 1], [], []>} : vector<4x32xf32>, vector<32x128xf32>, vector<4x128xf32> -> vector<4x128xf32>
    %151 = arith.addf %149, %150 : vector<4x128xf32>
    %152 = arith.negf %151 : vector<4x128xf32>
    %153 = math.exp %152 : vector<4x128xf32>
    %cst_33 = arith.constant 1.000000e+00 : f32
    %154 = vector.broadcast %cst_33 : f32 to vector<4x128xf32>
    %155 = arith.addf %154, %153 : vector<4x128xf32>
    %156 = arith.divf %154, %155 : vector<4x128xf32>
    %157 = vector.extract_strided_slice %151 {offsets = [0, 64], sizes = [4, 32], strides = [1, 1]} : vector<4x128xf32> to vector<4x32xf32>
    %158 = math.tanh %157 : vector<4x32xf32>
    %159 = vector.extract_strided_slice %156 {offsets = [0, 32], sizes = [4, 32], strides = [1, 1]} : vector<4x128xf32> to vector<4x32xf32>
    %160 = arith.mulf %159, %145 : vector<4x32xf32>
    %161 = vector.extract_strided_slice %156 {offsets = [0, 0], sizes = [4, 32], strides = [1, 1]} : vector<4x128xf32> to vector<4x32xf32>
    %162 = arith.mulf %161, %158 : vector<4x32xf32>
    %163 = arith.addf %160, %162 : vector<4x32xf32>
    %164 = vector.extract_strided_slice %156 {offsets = [0, 96], sizes = [4, 32], strides = [1, 1]} : vector<4x128xf32> to vector<4x32xf32>
    %165 = math.tanh %163 : vector<4x32xf32>
    %166 = arith.mulf %164, %165 : vector<4x32xf32>
    %167 = vector.extract_strided_slice %166 {offsets = [0, 0], sizes = [2, 32], strides = [1, 1]} : vector<4x32xf32> to vector<2x32xf32>
    %168 = vector.extract_strided_slice %166 {offsets = [2, 0], sizes = [2, 32], strides = [1, 1]} : vector<4x32xf32> to vector<2x32xf32>
    %169 = tpu.concatenate %167, %168 in 1 : vector<2x32xf32>, vector<2x32xf32> -> vector<2x64xf32>
    %c0_34 = arith.constant 0 : index
    %c0_35 = arith.constant 0 : index
    %170 = vector.load %arg7[%c0_34, %c0_35] : memref<64x64xf32, #tpu.memory_space<vmem>>, vector<64x64xf32>
    %cst_36 = arith.constant dense<0.000000e+00> : vector<2x64xf32>
    %171 = tpu.matmul %169, %170, %cst_36 {dimension_numbers = #tpu.dot_dimension_numbers<[1], [0], [0], [1], [0, 0, 1, 1], [], []>} : vector<2x64xf32>, vector<64x64xf32>, vector<2x64xf32> -> vector<2x64xf32>
    %c0_37 = arith.constant 0 : index
    %c0_38 = arith.constant 0 : index
    %172 = vector.load %arg8[%c0_37, %c0_38] : memref<1x64xf32, #tpu.memory_space<vmem>>, vector<1x64xf32>
    %173 = vector.broadcast %172 : vector<1x64xf32> to vector<2x64xf32>
    %174 = arith.addf %171, %173 : vector<2x64xf32>
    %cst_39 = arith.constant 0.000000e+00 : f32
    %175 = vector.broadcast %cst_39 : f32 to vector<2x64xf32>
    %176 = arith.maximumf %174, %175 : vector<2x64xf32>
    %c0_40 = arith.constant 0 : index
    %c0_41 = arith.constant 0 : index
    %177 = vector.load %arg9[%c0_40, %c0_41] : memref<64x64xf32, #tpu.memory_space<vmem>>, vector<64x64xf32>
    %cst_42 = arith.constant dense<0.000000e+00> : vector<2x64xf32>
    %178 = tpu.matmul %176, %177, %cst_42 {dimension_numbers = #tpu.dot_dimension_numbers<[1], [0], [0], [1], [0, 0, 1, 1], [], []>} : vector<2x64xf32>, vector<64x64xf32>, vector<2x64xf32> -> vector<2x64xf32>
    %c0_43 = arith.constant 0 : index
    %c0_44 = arith.constant 0 : index
    %179 = vector.load %arg10[%c0_43, %c0_44] : memref<1x64xf32, #tpu.memory_space<vmem>>, vector<1x64xf32>
    %180 = vector.broadcast %179 : vector<1x64xf32> to vector<2x64xf32>
    %181 = arith.addf %178, %180 : vector<2x64xf32>
    %cst_45 = arith.constant 0.000000e+00 : f32
    %182 = vector.broadcast %cst_45 : f32 to vector<2x64xf32>
    %183 = arith.maximumf %181, %182 : vector<2x64xf32>
    %c0_46 = arith.constant 0 : index
    %c0_47 = arith.constant 0 : index
    %184 = vector.load %arg11[%c0_46, %c0_47] : memref<64x64xf32, #tpu.memory_space<vmem>>, vector<64x64xf32>
    %cst_48 = arith.constant dense<0.000000e+00> : vector<2x64xf32>
    %185 = tpu.matmul %183, %184, %cst_48 {dimension_numbers = #tpu.dot_dimension_numbers<[1], [0], [0], [1], [0, 0, 1, 1], [], []>} : vector<2x64xf32>, vector<64x64xf32>, vector<2x64xf32> -> vector<2x64xf32>
    %c0_49 = arith.constant 0 : index
    %c0_50 = arith.constant 0 : index
    %186 = vector.load %arg12[%c0_49, %c0_50] : memref<1x64xf32, #tpu.memory_space<vmem>>, vector<1x64xf32>
    %187 = vector.broadcast %186 : vector<1x64xf32> to vector<2x64xf32>
    %188 = arith.addf %185, %187 : vector<2x64xf32>
    %cst_51 = arith.constant 0.000000e+00 : f32
    %189 = vector.broadcast %cst_51 : f32 to vector<2x64xf32>
    %190 = arith.maximumf %188, %189 : vector<2x64xf32>
    %c0_52 = arith.constant 0 : index
    %c0_53 = arith.constant 0 : index
    %191 = vector.load %arg13[%c0_52, %c0_53] : memref<64x128xf32, #tpu.memory_space<vmem>>, vector<64x128xf32>
    %cst_54 = arith.constant dense<0.000000e+00> : vector<2x128xf32>
    %192 = tpu.matmul %190, %191, %cst_54 {dimension_numbers = #tpu.dot_dimension_numbers<[1], [0], [0], [1], [0, 0, 1, 1], [], []>} : vector<2x64xf32>, vector<64x128xf32>, vector<2x128xf32> -> vector<2x128xf32>
    %c0_55 = arith.constant 0 : index
    %c0_56 = arith.constant 0 : index
    %193 = vector.load %arg14[%c0_55, %c0_56] : memref<1x128xf32, #tpu.memory_space<vmem>>, vector<1x128xf32>
    %194 = vector.broadcast %193 : vector<1x128xf32> to vector<2x128xf32>
    %195 = arith.addf %192, %194 : vector<2x128xf32>
    %c0_57 = arith.constant 0 : index
    %c0_58 = arith.constant 0 : index
    %196 = vector.load %arg15[%c0_57, %c0_58] : memref<2x128xf32, #tpu.memory_space<vmem>>, vector<2x128xf32>
    tpu.vector_store %arg15[%c0_57, %c0_58], %195 {strides = array<i32>} : memref<2x128xf32, #tpu.memory_space<vmem>>, vector<2x128xf32>,
    return
  }
}

</mosaic_0001>

<llo_original>
// kernel: snli_forward.1
$region0: #{snli_forward.1}
  #allocation0 [shape = 'u32[]', space=smem, size = 0x4, offset = 0x4, fixed_abs, tag = 'smem constant byte address 0x4 - core index']
  #allocation1 [shape = 'u32[144,128]{1,0:T(1,128)}', space=vmem, size = 0x12000, scoped, tag = 'internal scratch']
  %s0 = inlined_call_operand.vmem [shape: s32[32,1], index: 0, kind: input, shape index: {}]
  %s1 = inlined_call_operand.vmem [shape: f32[100,32], index: 1, kind: input, shape index: {}]
  %s2 = inlined_call_operand.hbm [shape: f32[32,32], index: 2, kind: input, shape index: {}]
  %s3 = inlined_call_operand.vmem [shape: f32[1,32], index: 3, kind: input, shape index: {}]
  %s4 = inlined_call_operand.hbm [shape: f32[32,128], index: 4, kind: input, shape index: {}]
  %s5 = inlined_call_operand.hbm [shape: f32[32,128], index: 5, kind: input, shape index: {}]
  %s6 = inlined_call_operand.hbm [shape: f32[1,128], index: 6, kind: input, shape index: {}]
  %s7 = inlined_call_operand.vmem [shape: f32[64,64], index: 7, kind: input, shape index: {}]
  %s8 = inlined_call_operand.hbm [shape: f32[1,64], index: 8, kind: input, shape index: {}]
  %s9 = inlined_call_operand.vmem [shape: f32[64,64], index: 9, kind: input, shape index: {}]
  %s10 = inlined_call_operand.hbm [shape: f32[1,64], index: 10, kind: input, shape index: {}]
  %s11 = inlined_call_operand.vmem [shape: f32[64,64], index: 11, kind: input, shape index: {}]
  %s12 = inlined_call_operand.hbm [shape: f32[1,64], index: 12, kind: input, shape index: {}]
  %s13 = inlined_call_operand.vmem [shape: f32[64,128], index: 13, kind: input, shape index: {}]
  %s14 = inlined_call_operand.hbm [shape: f32[1,128], index: 14, kind: input, shape index: {}]
  %s15 = inlined_call_operand.hbm [shape: f32[2,128], index: 15, kind: output, shape index: {}]
  %s16 = sld [smem:[#allocation0]]
  $region102: #{snli_forward.1} parent=0
    _
  %s18 = ssub.s32 1, %s16
  %s19 = scalar_select 0, %s18, %s16
  $region1: #{snli_forward.1} parent=0
    #allocation2 [shape = 'u8[16384]{0}', space=vmem, size = 0x4000, scoped, tag = 'input window, operand 2, single buffered']
    #allocation3 [shape = 's32[1]{0}', space=sflag, size = 0x4, scoped, tag = 'scoped memory for snli_forward.1']
    #allocation4 [shape = 's32[1]{0}', space=sflag, size = 0x4, scoped, tag = 'scoped memory for snli_forward.1']
    #allocation5 [shape = 'u8[16384]{0}', space=vmem, size = 0x4000, scoped, tag = 'input window, operand 4, single buffered']
    #allocation6 [shape = 's32[1]{0}', space=sflag, size = 0x4, scoped, tag = 'scoped memory for snli_forward.1']
    #allocation7 [shape = 'u8[16384]{0}', space=vmem, size = 0x4000, scoped, tag = 'input window, operand 5, single buffered']
    #allocation8 [shape = 'u8[512]{0}', space=vmem, size = 0x400, scoped, tag = 'input window, operand 6, single buffered']
    #allocation9 [shape = 's32[1]{0}', space=sflag, size = 0x4, scoped, tag = 'scoped memory for snli_forward.1']
    #allocation10 [shape = 'u8[512]{0}', space=vmem, size = 0x400, scoped, tag = 'input window, operand 8, single buffered']
    #allocation11 [shape = 'u8[512]{0}', space=vmem, size = 0x400, scoped, tag = 'input window, operand 10, single buffered']
    #allocation12 [shape = 's32[1]{0}', space=sflag, size = 0x4, scoped, tag = 'scoped memory for snli_forward.1']
    #allocation13 [shape = 'u8[512]{0}', space=vmem, size = 0x400, scoped, tag = 'input window, operand 12, single buffered']
    #allocation14 [shape = 'u8[512]{0}', space=vmem, size = 0x400, scoped, tag = 'input window, operand 14, single buffered']
    #allocation15 [shape = 's32[1]{0}', space=sflag, size = 0x4, scoped, tag = 'scoped memory for snli_forward.1']
    #allocation16 [shape = 'u8[1024]{0}', space=vmem, size = 0x400, scoped, tag = 'output window, operand 0, single buffered']
    %20 = vsyncpa [#allocation3], 0
    %21 = vsyncpa [#allocation6], 0
    %22 = vsyncpa [#allocation9], 0
    %23 = vsyncpa [#allocation12], 0
    %24 = vsyncpa [#allocation15], 0
    %25 = vsyncpa [#allocation4], 0
    // Predicated region
    $region2: #{snli_forward.1} parent=1 // pred_check
      _
    $region3: #{snli_forward.1} parent=1 // pred_check_branch
      %27 = sbr.rel (0) target = $region5
    $region4: #{snli_forward.1} parent=1 // pred_region
      _
    $region5: #{snli_forward.1} parent=1 // pred_fallthru
      _
    // Predicated region
    $region6: #{snli_forward.1} parent=1 // pred_check
      _
    $region7: #{snli_forward.1} parent=1 // pred_check_branch
      %29 = sbr.rel (0) target = $region9
    $region8: #{snli_forward.1} parent=1 // pred_region
      _
    $region9: #{snli_forward.1} parent=1 // pred_fallthru
      _
    // Predicated region
    $region10: #{snli_forward.1} parent=1 // pred_check
      _
    $region11: #{snli_forward.1} parent=1 // pred_check_branch
      %31 = sbr.rel (0) target = $region13
    $region12: #{snli_forward.1} parent=1 // pred_region
      %s33 = ssub.s32 512, 512
      %34 = vsyncadd [#allocation3], %s33
      %s35 = sshll.u32 [#allocation2], 4
      %s36 = int_to_ptr.vmem [resolvable:$true] %s35
      %41 = dma.hbm_to_vmem [thread:$0]  %s2, 512, %s36, [#allocation3], 128, 128, 8
    $region13: #{snli_forward.1} parent=1 // pred_fallthru
      _
    // Predicated region
    $region14: #{snli_forward.1} parent=1 // pred_check
      _
    $region15: #{snli_forward.1} parent=1 // pred_check_branch
      %43 = sbr.rel (0) target = $region17
    $region16: #{snli_forward.1} parent=1 // pred_region
      _
    $region17: #{snli_forward.1} parent=1 // pred_fallthru
      _
    // Predicated region
    $region18: #{snli_forward.1} parent=1 // pred_check
      _
    $region19: #{snli_forward.1} parent=1 // pred_check_branch
      %45 = sbr.rel (0) target = $region21
    $region20: #{snli_forward.1} parent=1 // pred_region
      %s47 = ssub.s32 512, 512
      %48 = vsyncadd [#allocation6], %s47
      %s49 = sshll.u32 [#allocation5], 4
      %s50 = int_to_ptr.vmem [resolvable:$true] %s49
      %55 = dma.hbm_to_vmem [thread:$0]  %s4, 512, %s50, [#allocation6], 128, 128, 8
    $region21: #{snli_forward.1} parent=1 // pred_fallthru
      _
    // Predicated region
    $region22: #{snli_forward.1} parent=1 // pred_check
      _
    $region23: #{snli_forward.1} parent=1 // pred_check_branch
      %57 = sbr.rel (0) target = $region25
    $region24: #{snli_forward.1} parent=1 // pred_region
      %s59 = ssub.s32 512, 512
      %60 = vsyncadd [#allocation6], %s59
      %s61 = sshll.u32 [#allocation7], 4
      %s62 = int_to_ptr.vmem [resolvable:$true] %s61
      %67 = dma.hbm_to_vmem [thread:$0]  %s5, 512, %s62, [#allocation6], 128, 128, 8
    $region25: #{snli_forward.1} parent=1 // pred_fallthru
      _
    // Predicated region
    $region26: #{snli_forward.1} parent=1 // pred_check
      _
    $region27: #{snli_forward.1} parent=1 // pred_check_branch
      %69 = sbr.rel (0) target = $region29
    $region28: #{snli_forward.1} parent=1 // pred_region
      %s71 = ssub.s32 16, 16
      %72 = vsyncadd [#allocation9], %s71
      %s74 = sshll.u32 [#allocation8], 4
      %s75 = int_to_ptr.vmem [resolvable:$true] %s74
      %77 = dma.hbm_to_vmem [thread:$0]  %s6, 16, %s75, [#allocation9]
    $region29: #{snli_forward.1} parent=1 // pred_fallthru
      _
    // Predicated region
    $region30: #{snli_forward.1} parent=1 // pred_check
      _
    $region31: #{snli_forward.1} parent=1 // pred_check_branch
      %79 = sbr.rel (0) target = $region33
    $region32: #{snli_forward.1} parent=1 // pred_region
      _
    $region33: #{snli_forward.1} parent=1 // pred_fallthru
      _
    // Predicated region
    $region34: #{snli_forward.1} parent=1 // pred_check
      _
    $region35: #{snli_forward.1} parent=1 // pred_check_branch
      %81 = sbr.rel (0) target = $region37
    $region36: #{snli_forward.1} parent=1 // pred_region
      %s83 = ssub.s32 16, 16
      %84 = vsyncadd [#allocation9], %s83
      %s86 = sshll.u32 [#allocation10], 4
      %s87 = int_to_ptr.vmem [resolvable:$true] %s86
      %89 = dma.hbm_to_vmem [thread:$0]  %s8, 16, %s87, [#allocation9]
    $region37: #{snli_forward.1} parent=1 // pred_fallthru
      _
    // Predicated region
    $region38: #{snli_forward.1} parent=1 // pred_check
      _
    $region39: #{snli_forward.1} parent=1 // pred_check_branch
      %91 = sbr.rel (0) target = $region41
    $region40: #{snli_forward.1} parent=1 // pred_region
      _
    $region41: #{snli_forward.1} parent=1 // pred_fallthru
      _
    // Predicated region
    $region42: #{snli_forward.1} parent=1 // pred_check
      _
    $region43: #{snli_forward.1} parent=1 // pred_check_branch
      %93 = sbr.rel (0) target = $region45
    $region44: #{snli_forward.1} parent=1 // pred_region
      %s95 = ssub.s32 16, 16
      %96 = vsyncadd [#allocation12], %s95
      %s98 = sshll.u32 [#allocation11], 4
      %s99 = int_to_ptr.vmem [resolvable:$true] %s98
      %101 = dma.hbm_to_vmem [thread:$0]  %s10, 16, %s99, [#allocation12]
    $region45: #{snli_forward.1} parent=1 // pred_fallthru
      _
    // Predicated region
    $region46: #{snli_forward.1} parent=1 // pred_check
      _
    $region47: #{snli_forward.1} parent=1 // pred_check_branch
      %103 = sbr.rel (0) target = $region49
    $region48: #{snli_forward.1} parent=1 // pred_region
      _
    $region49: #{snli_forward.1} parent=1 // pred_fallthru
      _
    // Predicated region
    $region50: #{snli_forward.1} parent=1 // pred_check
      _
    $region51: #{snli_forward.1} parent=1 // pred_check_branch
      %105 = sbr.rel (0) target = $region53
    $region52: #{snli_forward.1} parent=1 // pred_region
      %s107 = ssub.s32 16, 16
      %108 = vsyncadd [#allocation12], %s107
      %s110 = sshll.u32 [#allocation13], 4
      %s111 = int_to_ptr.vmem [resolvable:$true] %s110
      %113 = dma.hbm_to_vmem [thread:$0]  %s12, 16, %s111, [#allocation12]
    $region53: #{snli_forward.1} parent=1 // pred_fallthru
      _
    // Predicated region
    $region54: #{snli_forward.1} parent=1 // pred_check
      _
    $region55: #{snli_forward.1} parent=1 // pred_check_branch
      %115 = sbr.rel (0) target = $region57
    $region56: #{snli_forward.1} parent=1 // pred_region
      _
    $region57: #{snli_forward.1} parent=1 // pred_fallthru
      _
    // Predicated region
    $region58: #{snli_forward.1} parent=1 // pred_check
      _
    $region59: #{snli_forward.1} parent=1 // pred_check_branch
      %117 = sbr.rel (0) target = $region61
    $region60: #{snli_forward.1} parent=1 // pred_region
      %s119 = ssub.s32 16, 16
      %120 = vsyncadd [#allocation15], %s119
      %s122 = sshll.u32 [#allocation14], 4
      %s123 = int_to_ptr.vmem [resolvable:$true] %s122
      %125 = dma.hbm_to_vmem [thread:$0]  %s14, 16, %s123, [#allocation15]
    $region61: #{snli_forward.1} parent=1 // pred_fallthru
      _
    // Predicated region
    $region62: #{snli_forward.1} parent=1 // pred_check
      _
    $region63: #{snli_forward.1} parent=1 // pred_check_branch
      %127 = sbr.rel (0) target = $region65
    $region64: #{snli_forward.1} parent=1 // pred_region
      %128 = dma.done [#allocation3], 512
    $region65: #{snli_forward.1} parent=1 // pred_fallthru
      _
    // Predicated region
    $region66: #{snli_forward.1} parent=1 // pred_check
      _
    $region67: #{snli_forward.1} parent=1 // pred_check_branch
      %130 = sbr.rel (0) target = $region69
    $region68: #{snli_forward.1} parent=1 // pred_region
      %131 = dma.done [#allocation6], 512
    $region69: #{snli_forward.1} parent=1 // pred_fallthru
      _
    // Predicated region
    $region70: #{snli_forward.1} parent=1 // pred_check
      _
    $region71: #{snli_forward.1} parent=1 // pred_check_branch
      %133 = sbr.rel (0) target = $region73
    $region72: #{snli_forward.1} parent=1 // pred_region
      %134 = dma.done [#allocation6], 512
    $region73: #{snli_forward.1} parent=1 // pred_fallthru
      _
    // Predicated region
    $region74: #{snli_forward.1} parent=1 // pred_check
      _
    $region75: #{snli_forward.1} parent=1 // pred_check_branch
      %136 = sbr.rel (0) target = $region77
    $region76: #{snli_forward.1} parent=1 // pred_region
      %137 = dma.done [#allocation9], 16
    $region77: #{snli_forward.1} parent=1 // pred_fallthru
      _
    // Predicated region
    $region78: #{snli_forward.1} parent=1 // pred_check
      _
    $region79: #{snli_forward.1} parent=1 // pred_check_branch
      %139 = sbr.rel (0) target = $region81
    $region80: #{snli_forward.1} parent=1 // pred_region
      %140 = dma.done [#allocation9], 16
    $region81: #{snli_forward.1} parent=1 // pred_fallthru
      _
    // Predicated region
    $region82: #{snli_forward.1} parent=1 // pred_check
      _
    $region83: #{snli_forward.1} parent=1 // pred_check_branch
      %142 = sbr.rel (0) target = $region85
    $region84: #{snli_forward.1} parent=1 // pred_region
      %143 = dma.done [#allocation12], 16
    $region85: #{snli_forward.1} parent=1 // pred_fallthru
      _
    // Predicated region
    $region86: #{snli_forward.1} parent=1 // pred_check
      _
    $region87: #{snli_forward.1} parent=1 // pred_check_branch
      %145 = sbr.rel (0) target = $region89
    $region88: #{snli_forward.1} parent=1 // pred_region
      %146 = dma.done [#allocation12], 16
    $region89: #{snli_forward.1} parent=1 // pred_fallthru
      _
    // Predicated region
    $region90: #{snli_forward.1} parent=1 // pred_check
      _
    $region91: #{snli_forward.1} parent=1 // pred_check_branch
      %148 = sbr.rel (0) target = $region93
    $region92: #{snli_forward.1} parent=1 // pred_region
      %149 = dma.done [#allocation15], 16
    $region93: #{snli_forward.1} parent=1 // pred_fallthru
      _
    %v150 = vld [vmem:[%s0] sm:$0xff]
    %v151 = vld [vmem:[%s0 + $0x8] sm:$0xff]
    %v152 = vld [vmem:[%s0 + $0x10] sm:$0xff]
    %v153 = vld [vmem:[%s0 + $0x18] sm:$0xff]
    %v154 = vlaneseq
    %v155 = vand.u32 %v154, 127
    %156 = vset.pattern.permute.xlu0 0
    %157 = vperm.xlu0 %156, %v150
    %v158 = vpop.permute.xlu0 %157
    %159 = vset.pattern.permute.xlu0 0
    %160 = vperm.xlu0 %159, %v151
    %v161 = vpop.permute.xlu0 %160
    %162 = vset.pattern.permute.xlu0 0
    %163 = vperm.xlu0 %162, %v152
    %v164 = vpop.permute.xlu0 %163
    %165 = vset.pattern.permute.xlu0 0
    %166 = vperm.xlu0 %165, %v153
    %v167 = vpop.permute.xlu0 %166
    %vm168 = vcmp.eq.s32.totalorder %v155, %v158
    %vm169 = vcmp.eq.s32.totalorder %v155, %v161
    %vm170 = vcmp.eq.s32.totalorder %v155, %v164
    %vm171 = vcmp.eq.s32.totalorder %v155, %v167
    %v172 = vsel %vm168, 1, 0
    %v173 = vsel %vm169, 1, 0
    %v174 = vsel %vm170, 1, 0
    %v175 = vsel %vm171, 1, 0
    %v176 = vcvt.s32.f32 %v172
    %v177 = vcvt.s32.f32 %v173
    %v178 = vcvt.s32.f32 %v174
    %v179 = vcvt.s32.f32 %v175
    %v180 = vld [vmem:[%s1] sm:$0xff]
    %v181 = vld [vmem:[%s1 + $0x8] sm:$0xff]
    %v182 = vld [vmem:[%s1 + $0x10] sm:$0xff]
    %v183 = vld [vmem:[%s1 + $0x18] sm:$0xff]
    %v184 = vld [vmem:[%s1 + $0x20] sm:$0xff]
    %v185 = vld [vmem:[%s1 + $0x28] sm:$0xff]
    %v186 = vld [vmem:[%s1 + $0x30] sm:$0xff]
    %v187 = vld [vmem:[%s1 + $0x38] sm:$0xff]
    %v188 = vld [vmem:[%s1 + $0x40] sm:$0xff]
    %v189 = vld [vmem:[%s1 + $0x48] sm:$0xff]
    %v190 = vld [vmem:[%s1 + $0x50] sm:$0xff]
    %v191 = vld [vmem:[%s1 + $0x58] sm:$0xff]
    %v192 = vld [vmem:[%s1 + $0x60] sm:$0xf]
    %vm193 = vcmask 818176
    %v195 = vsel %vm193, %v176, 0
    %v198 = vsel %vm193, %v177, 0
    %v201 = vsel %vm193, %v178, 0
    %v204 = vsel %vm193, %v179, 0
    %vm206 = vcmask 1043456
    %v208 = vsel %vm206, %v192, 0
    %210 = vmatprep.subr.mxu0 0.0
    %211 = vmatpush1.msra.mxu0 %v180
    %212 = vmatprep.subr.mxu0 0.0
    %213 = vmatpush1.msra.mxu0 %v181
    %214 = vmatprep.subr.mxu0 0.0
    %215 = vmatpush1.msra.mxu0 %v182
    %216 = vmatprep.subr.mxu0 0.0
    %217 = vmatpush1.msra.mxu0 %v183
    %218 = vmatprep.subr.mxu0 0.0
    %219 = vmatpush1.msra.mxu0 %v184
    %220 = vmatprep.subr.mxu0 0.0
    %221 = vmatpush1.msra.mxu0 %v185
    %222 = vmatprep.subr.mxu0 0.0
    %223 = vmatpush1.msra.mxu0 %v186
    %224 = vmatprep.subr.mxu0 0.0
    %225 = vmatpush1.msra.mxu0 %v187
    %226 = vmatprep.subr.mxu0 0.0
    %227 = vmatpush1.msra.mxu0 %v188
    %228 = vmatprep.subr.mxu0 0.0
    %229 = vmatpush1.msra.mxu0 %v189
    %230 = vmatprep.subr.mxu0 0.0
    %231 = vmatpush1.msra.mxu0 %v190
    %232 = vmatprep.subr.mxu0 0.0
    %233 = vmatpush1.msra.mxu0 %v191
    %234 = vmatprep.subr.mxu0 0.0
    %235 = vmatpush1.msra.mxu0 %v208
    %236 = vmatprep.subr.mxu0 0.0
    %237 = vmatpush1.msra.mxu0 0.0
    %238 = vmatprep.subr.mxu0 0.0
    %239 = vmatpush1.msra.mxu0 0.0
    %240 = vmatprep.subr.mxu0 0.0
    %241 = vmatpush1.msra.mxu0 0.0
    %242 = vmatprep.subr.mxu0 0.0
    %243 = vmatpush1.msra.mxu0 0.0
    %244 = vmatprep.subr.mxu0 0.0
    %245 = vmatpush1.msra.mxu0 0.0
    %246 = vmatprep.subr.mxu0 0.0
    %247 = vmatpush1.msra.mxu0 0.0
    %248 = vmatprep.subr.mxu0 0.0
    %249 = vmatpush1.msra.mxu0 0.0
    %250 = vmatprep.subr.mxu0 0.0
    %251 = vmatpush1.msra.mxu0 0.0
    %252 = vmatprep.subr.mxu0 0.0
    %253 = vmatpush1.msra.mxu0 0.0
    %254 = vmatprep.subr.mxu0 0.0
    %255 = vmatpush1.msra.mxu0 0.0
    %256 = vmatprep.subr.mxu0 0.0
    %257 = vmatpush1.msra.mxu0 0.0
    %258 = vmatprep.subr.mxu0 0.0
    %259 = vmatpush1.msra.mxu0 0.0
    %260 = vmatprep.subr.mxu0 0.0
    %261 = vmatpush1.msra.mxu0 0.0
    %262 = vmatprep.subr.mxu0 0.0
    %263 = vmatpush1.msra.mxu0 0.0
    %264 = vmatprep.subr.mxu0 0.0
    %265 = vmatpush1.msra.mxu0 0.0
    %266 = vmatprep.subr.mxu0 0.0
    %267 = vmatpush1.msra.mxu0 0.0
    %268 = vmatprep.subr.mxu0 0.0
    %269 = vmatpush1.msra.mxu0 0.0
    %270 = vmatprep.subr.mxu0 0.0
    %271 = vmatpush1.msra.mxu0 0.0
    %272 = vmatprep.subr.mxu0 0.0
    %273 = vmatpush1.msra.mxu0 0.0
    %274 = vmatprep.mubr.f32.mxu0 0.0
    %275 = vmatmul.mubr.f32.gmra.mrb[0].mxu0 %v195
    %v276 = vpop.f32.mrb[0].mxu0
    %v277 = vadd.f32 0.0, %v276
    %v278 = vpop.f32.mrb[0].mxu0
    %279 = vmatprep.mubr.f32.mxu0 0.0
    %280 = vmatmul.mubr.f32.gmra.mrb[0].mxu0 %v198
    %v281 = vpop.f32.mrb[0].mxu0
    %v282 = vadd.f32 0.0, %v281
    %v283 = vpop.f32.mrb[0].mxu0
    %284 = vmatprep.mubr.f32.mxu0 0.0
    %285 = vmatmul.mubr.f32.gmra.mrb[0].mxu0 %v201
    %v286 = vpop.f32.mrb[0].mxu0
    %v287 = vadd.f32 0.0, %v286
    %v288 = vpop.f32.mrb[0].mxu0
    %289 = vmatprep.mubr.f32.mxu0 0.0
    %290 = vmatmul.mubr.f32.gmra.mrb[0].mxu0 %v204
    %v291 = vpop.f32.mrb[0].mxu0
    %v292 = vadd.f32 0.0, %v291
    %v293 = vpop.f32.mrb[0].mxu0
    %294 = vdwg.mxu0
    %v295 = vld [vmem:[#allocation2] sm:$0xff]
    %v296 = vld [vmem:[#allocation2 + $0x8] sm:$0xff]
    %v297 = vld [vmem:[#allocation2 + $0x10] sm:$0xff]
    %v298 = vld [vmem:[#allocation2 + $0x18] sm:$0xff]
    %v299 = vld [vmem:[%s3] sm:$0x1]
    %v301 = vlaneseq
    %v302 = vshrl.u32 %v301, 7
    %v303 = vsub.s32 0, %v302
    %v304 = vrot.slane %v299, %v303
    %vm306 = vcmask 261120
    %v308 = vsel %vm306, %v277, 0
    %v311 = vsel %vm306, %v282, 0
    %v314 = vsel %vm306, %v287, 0
    %v317 = vsel %vm306, %v292, 0
    %319 = vmatprep.subr.mxu0 0.0
    %320 = vmatpush1.msra.mxu0 %v295
    %321 = vmatprep.subr.mxu0 0.0
    %322 = vmatpush1.msra.mxu0 %v296
    %323 = vmatprep.subr.mxu0 0.0
    %324 = vmatpush1.msra.mxu0 %v297
    %325 = vmatprep.subr.mxu0 0.0
    %326 = vmatpush1.msra.mxu0 %v298
    %327 = vmatprep.subr.mxu0 0.0
    %328 = vmatpush1.msra.mxu0 0.0
    %329 = vmatprep.subr.mxu0 0.0
    %330 = vmatpush1.msra.mxu0 0.0
    %331 = vmatprep.subr.mxu0 0.0
    %332 = vmatpush1.msra.mxu0 0.0
    %333 = vmatprep.subr.mxu0 0.0
    %334 = vmatpush1.msra.mxu0 0.0
    %335 = vmatprep.subr.mxu0 0.0
    %336 = vmatpush1.msra.mxu0 0.0
    %337 = vmatprep.subr.mxu0 0.0
    %338 = vmatpush1.msra.mxu0 0.0
    %339 = vmatprep.subr.mxu0 0.0
    %340 = vmatpush1.msra.mxu0 0.0
    %341 = vmatprep.subr.mxu0 0.0
    %342 = vmatpush1.msra.mxu0 0.0
    %343 = vmatprep.subr.mxu0 0.0
    %344 = vmatpush1.msra.mxu0 0.0
    %345 = vmatprep.subr.mxu0 0.0
    %346 = vmatpush1.msra.mxu0 0.0
    %347 = vmatprep.subr.mxu0 0.0
    %348 = vmatpush1.msra.mxu0 0.0
    %349 = vmatprep.subr.mxu0 0.0
    %350 = vmatpush1.msra.mxu0 0.0
    %351 = vmatprep.subr.mxu0 0.0
    %352 = vmatpush1.msra.mxu0 0.0
    %353 = vmatprep.subr.mxu0 0.0
    %354 = vmatpush1.msra.mxu0 0.0
    %355 = vmatprep.subr.mxu0 0.0
    %356 = vmatpush1.msra.mxu0 0.0
    %357 = vmatprep.subr.mxu0 0.0
    %358 = vmatpush1.msra.mxu0 0.0
    %359 = vmatprep.subr.mxu0 0.0
    %360 = vmatpush1.msra.mxu0 0.0
    %361 = vmatprep.subr.mxu0 0.0
    %362 = vmatpush1.msra.mxu0 0.0
    %363 = vmatprep.subr.mxu0 0.0
    %364 = vmatpush1.msra.mxu0 0.0
    %365 = vmatprep.subr.mxu0 0.0
    %366 = vmatpush1.msra.mxu0 0.0
    %367 = vmatprep.subr.mxu0 0.0
    %368 = vmatpush1.msra.mxu0 0.0
    %369 = vmatprep.subr.mxu0 0.0
    %370 = vmatpush1.msra.mxu0 0.0
    %371 = vmatprep.subr.mxu0 0.0
    %372 = vmatpush1.msra.mxu0 0.0
    %373 = vmatprep.subr.mxu0 0.0
    %374 = vmatpush1.msra.mxu0 0.0
    %375 = vmatprep.subr.mxu0 0.0
    %376 = vmatpush1.msra.mxu0 0.0
    %377 = vmatprep.subr.mxu0 0.0
    %378 = vmatpush1.msra.mxu0 0.0
    %379 = vmatprep.subr.mxu0 0.0
    %380 = vmatpush1.msra.mxu0 0.0
    %381 = vmatprep.subr.mxu0 0.0
    %382 = vmatpush1.msra.mxu0 0.0
    %383 = vmatprep.mubr.f32.mxu0 0.0
    %384 = vmatmul.mubr.f32.gmra.mrb[0].mxu0 %v308
    %v385 = vpop.f32.mrb[0].mxu0
    %v386 = vadd.f32 %v304, %v385
    %v387 = vpop.f32.mrb[0].mxu0
    %388 = vmatprep.mubr.f32.mxu0 0.0
    %389 = vmatmul.mubr.f32.gmra.mrb[0].mxu0 %v311
    %v390 = vpop.f32.mrb[0].mxu0
    %v391 = vadd.f32 %v304, %v390
    %v392 = vpop.f32.mrb[0].mxu0
    %393 = vmatprep.mubr.f32.mxu0 0.0
    %394 = vmatmul.mubr.f32.gmra.mrb[0].mxu0 %v314
    %v395 = vpop.f32.mrb[0].mxu0
    %v396 = vadd.f32 %v304, %v395
    %v397 = vpop.f32.mrb[0].mxu0
    %398 = vmatprep.mubr.f32.mxu0 0.0
    %399 = vmatmul.mubr.f32.gmra.mrb[0].mxu0 %v317
    %v400 = vpop.f32.mrb[0].mxu0
    %v401 = vadd.f32 %v304, %v400
    %v402 = vpop.f32.mrb[0].mxu0
    %403 = vdwg.mxu0
    %v404 = vmax.f32 %v386, 0.0
    %v405 = vmax.f32 %v391, 0.0
    %v406 = vmax.f32 %v396, 0.0
    %v407 = vmax.f32 %v401, 0.0
    %v408 = vld [vmem:[#allocation5] sm:$0xff]
    %v409 = vld [vmem:[#allocation5 + $0x8] sm:$0xff]
    %v410 = vld [vmem:[#allocation5 + $0x10] sm:$0xff]
    %v411 = vld [vmem:[#allocation5 + $0x18] sm:$0xff]
    %v412 = vld [vmem:[#allocation8] sm:$0x1]
    %v414 = vlaneseq
    %v415 = vshrl.u32 %v414, 7
    %v416 = vsub.s32 0, %v415
    %v417 = vrot.slane %v412, %v416
    %v420 = vsel %vm306, %v404, 0
    %v423 = vsel %vm306, %v405, 0
    %v426 = vsel %vm306, %v406, 0
    %v429 = vsel %vm306, %v407, 0
    %431 = vmatprep.subr.mxu0 0.0
    %432 = vmatpush1.msra.mxu0 %v408
    %433 = vmatprep.subr.mxu0 0.0
    %434 = vmatpush1.msra.mxu0 %v409
    %435 = vmatprep.subr.mxu0 0.0
    %436 = vmatpush1.msra.mxu0 %v410
    %437 = vmatprep.subr.mxu0 0.0
    %438 = vmatpush1.msra.mxu0 %v411
    %439 = vmatprep.subr.mxu0 0.0
    %440 = vmatpush1.msra.mxu0 0.0
    %441 = vmatprep.subr.mxu0 0.0
    %442 = vmatpush1.msra.mxu0 0.0
    %443 = vmatprep.subr.mxu0 0.0
    %444 = vmatpush1.msra.mxu0 0.0
    %445 = vmatprep.subr.mxu0 0.0
    %446 = vmatpush1.msra.mxu0 0.0
    %447 = vmatprep.subr.mxu0 0.0
    %448 = vmatpush1.msra.mxu0 0.0
    %449 = vmatprep.subr.mxu0 0.0
    %450 = vmatpush1.msra.mxu0 0.0
    %451 = vmatprep.subr.mxu0 0.0
    %452 = vmatpush1.msra.mxu0 0.0
    %453 = vmatprep.subr.mxu0 0.0
    %454 = vmatpush1.msra.mxu0 0.0
    %455 = vmatprep.subr.mxu0 0.0
    %456 = vmatpush1.msra.mxu0 0.0
    %457 = vmatprep.subr.mxu0 0.0
    %458 = vmatpush1.msra.mxu0 0.0
    %459 = vmatprep.subr.mxu0 0.0
    %460 = vmatpush1.msra.mxu0 0.0
    %461 = vmatprep.subr.mxu0 0.0
    %462 = vmatpush1.msra.mxu0 0.0
    %463 = vmatprep.subr.mxu0 0.0
    %464 = vmatpush1.msra.mxu0 0.0
    %465 = vmatprep.subr.mxu0 0.0
    %466 = vmatpush1.msra.mxu0 0.0
    %467 = vmatprep.subr.mxu0 0.0
    %468 = vmatpush1.msra.mxu0 0.0
    %469 = vmatprep.subr.mxu0 0.0
    %470 = vmatpush1.msra.mxu0 0.0
    %471 = vmatprep.subr.mxu0 0.0
    %472 = vmatpush1.msra.mxu0 0.0
    %473 = vmatprep.subr.mxu0 0.0
    %474 = vmatpush1.msra.mxu0 0.0
    %475 = vmatprep.subr.mxu0 0.0
    %476 = vmatpush1.msra.mxu0 0.0
    %477 = vmatprep.subr.mxu0 0.0
    %478 = vmatpush1.msra.mxu0 0.0
    %479 = vmatprep.subr.mxu0 0.0
    %480 = vmatpush1.msra.mxu0 0.0
    %481 = vmatprep.subr.mxu0 0.0
    %482 = vmatpush1.msra.mxu0 0.0
    %483 = vmatprep.subr.mxu0 0.0
    %484 = vmatpush1.msra.mxu0 0.0
    %485 = vmatprep.subr.mxu0 0.0
    %486 = vmatpush1.msra.mxu0 0.0
    %487 = vmatprep.subr.mxu0 0.0
    %488 = vmatpush1.msra.mxu0 0.0
    %489 = vmatprep.subr.mxu0 0.0
    %490 = vmatpush1.msra.mxu0 0.0
    %491 = vmatprep.subr.mxu0 0.0
    %492 = vmatpush1.msra.mxu0 0.0
    %493 = vmatprep.subr.mxu0 0.0
    %494 = vmatpush1.msra.mxu0 0.0
    %495 = vmatprep.mubr.f32.mxu0 0.0
    %496 = vmatmul.mubr.f32.gmra.mrb[0].mxu0 %v420
    %v497 = vpop.f32.mrb[0].mxu0
    %v498 = vadd.f32 %v417, %v497
    %v499 = vpop.f32.mrb[0].mxu0
    %500 = vmatprep.mubr.f32.mxu0 0.0
    %501 = vmatmul.mubr.f32.gmra.mrb[0].mxu0 %v423
    %v502 = vpop.f32.mrb[0].mxu0
    %v503 = vadd.f32 %v417, %v502
    %v504 = vpop.f32.mrb[0].mxu0
    %505 = vmatprep.mubr.f32.mxu0 0.0
    %506 = vmatmul.mubr.f32.gmra.mrb[0].mxu0 %v426
    %v507 = vpop.f32.mrb[0].mxu0
    %v508 = vadd.f32 %v417, %v507
    %v509 = vpop.f32.mrb[0].mxu0
    %510 = vmatprep.mubr.f32.mxu0 0.0
    %511 = vmatmul.mubr.f32.gmra.mrb[0].mxu0 %v429
    %v512 = vpop.f32.mrb[0].mxu0
    %v513 = vadd.f32 %v417, %v512
    %v514 = vpop.f32.mrb[0].mxu0
    %515 = vdwg.mxu0
    %v516 = vld [vmem:[#allocation7] sm:$0xff]
    %v517 = vld [vmem:[#allocation7 + $0x8] sm:$0xff]
    %v518 = vld [vmem:[#allocation7 + $0x10] sm:$0xff]
    %v519 = vld [vmem:[#allocation7 + $0x18] sm:$0xff]
    %v521 = vsel %vm306, 0.0, 0
    %523 = vmatprep.subr.mxu0 0.0
    %524 = vmatpush1.msra.mxu0 %v516
    %525 = vmatprep.subr.mxu0 0.0
    %526 = vmatpush1.msra.mxu0 %v517
    %527 = vmatprep.subr.mxu0 0.0
    %528 = vmatpush1.msra.mxu0 %v518
    %529 = vmatprep.subr.mxu0 0.0
    %530 = vmatpush1.msra.mxu0 %v519
    %531 = vmatprep.subr.mxu0 0.0
    %532 = vmatpush1.msra.mxu0 0.0
    %533 = vmatprep.subr.mxu0 0.0
    %534 = vmatpush1.msra.mxu0 0.0
    %535 = vmatprep.subr.mxu0 0.0
    %536 = vmatpush1.msra.mxu0 0.0
    %537 = vmatprep.subr.mxu0 0.0
    %538 = vmatpush1.msra.mxu0 0.0
    %539 = vmatprep.subr.mxu0 0.0
    %540 = vmatpush1.msra.mxu0 0.0
    %541 = vmatprep.subr.mxu0 0.0
    %542 = vmatpush1.msra.mxu0 0.0
    %543 = vmatprep.subr.mxu0 0.0
    %544 = vmatpush1.msra.mxu0 0.0
    %545 = vmatprep.subr.mxu0 0.0
    %546 = vmatpush1.msra.mxu0 0.0
    %547 = vmatprep.subr.mxu0 0.0
    %548 = vmatpush1.msra.mxu0 0.0
    %549 = vmatprep.subr.mxu0 0.0
    %550 = vmatpush1.msra.mxu0 0.0
    %551 = vmatprep.subr.mxu0 0.0
    %552 = vmatpush1.msra.mxu0 0.0
    %553 = vmatprep.subr.mxu0 0.0
    %554 = vmatpush1.msra.mxu0 0.0
    %555 = vmatprep.subr.mxu0 0.0
    %556 = vmatpush1.msra.mxu0 0.0
    %557 = vmatprep.subr.mxu0 0.0
    %558 = vmatpush1.msra.mxu0 0.0
    %559 = vmatprep.subr.mxu0 0.0
    %560 = vmatpush1.msra.mxu0 0.0
    %561 = vmatprep.subr.mxu0 0.0
    %562 = vmatpush1.msra.mxu0 0.0
    %563 = vmatprep.subr.mxu0 0.0
    %564 = vmatpush1.msra.mxu0 0.0
    %565 = vmatprep.subr.mxu0 0.0
    %566 = vmatpush1.msra.mxu0 0.0
    %567 = vmatprep.subr.mxu0 0.0
    %568 = vmatpush1.msra.mxu0 0.0
    %569 = vmatprep.subr.mxu0 0.0
    %570 = vmatpush1.msra.mxu0 0.0
    %571 = vmatprep.subr.mxu0 0.0
    %572 = vmatpush1.msra.mxu0 0.0
    %573 = vmatprep.subr.mxu0 0.0
    %574 = vmatpush1.msra.mxu0 0.0
    %575 = vmatprep.subr.mxu0 0.0
    %576 = vmatpush1.msra.mxu0 0.0
    %577 = vmatprep.subr.mxu0 0.0
    %578 = vmatpush1.msra.mxu0 0.0
    %579 = vmatprep.subr.mxu0 0.0
    %580 = vmatpush1.msra.mxu0 0.0
    %581 = vmatprep.subr.mxu0 0.0
    %582 = vmatpush1.msra.mxu0 0.0
    %583 = vmatprep.subr.mxu0 0.0
    %584 = vmatpush1.msra.mxu0 0.0
    %585 = vmatprep.subr.mxu0 0.0
    %586 = vmatpush1.msra.mxu0 0.0
    %587 = vmatprep.mubr.f32.mxu0 0.0
    %588 = vmatmul.mubr.f32.gmra.mrb[0].mxu0 %v521
    %v589 = vpop.f32.mrb[0].mxu0
    %v590 = vadd.f32 0.0, %v589
    %v591 = vpop.f32.mrb[0].mxu0
    %592 = vdwg.mxu0
    %v593 = vadd.f32 %v498, %v590
    %v594 = vxor.u32 %v593, 2147483648
    %v595 = vmul.f32 %v594, 1.442695
    %v596 = vpow.pop %v595
    %v597 = vadd.f32 %v596, 1.0
    %v598 = vrcp.pop %v597
    %v599 = vmul.f32 1.0, %v598
    %v600 = vtanh.pop %v593
    %v601 = vmul.f32 %v599, 0.0
    %603 = vrot.lane.b32.xlu0 %v600, 64
    %v604 = vpop.permute.xlu0 %603
    %v606 = vmul.f32 %v599, %v604
    %608 = vrot.lane.b32.xlu0 %v606, 32
    %v609 = vpop.permute.xlu0 %608
    %v611 = vadd.f32 %v601, %v609
    %v612 = vtanh.pop %v611
    %614 = vrot.lane.b32.xlu0 %v612, 64
    %v615 = vpop.permute.xlu0 %614
    %v617 = vmul.f32 %v599, %v615
    %619 = vrot.lane.b32.xlu0 %v617, 32
    %v620 = vpop.permute.xlu0 %619
    %v621 = vsel %vm306, %v620, 0
    %623 = vmatprep.subr.mxu0 0.0
    %624 = vmatpush1.msra.mxu0 %v516
    %625 = vmatprep.subr.mxu0 0.0
    %626 = vmatpush1.msra.mxu0 %v517
    %627 = vmatprep.subr.mxu0 0.0
    %628 = vmatpush1.msra.mxu0 %v518
    %629 = vmatprep.subr.mxu0 0.0
    %630 = vmatpush1.msra.mxu0 %v519
    %631 = vmatprep.subr.mxu0 0.0
    %632 = vmatpush1.msra.mxu0 0.0
    %633 = vmatprep.subr.mxu0 0.0
    %634 = vmatpush1.msra.mxu0 0.0
    %635 = vmatprep.subr.mxu0 0.0
    %636 = vmatpush1.msra.mxu0 0.0
    %637 = vmatprep.subr.mxu0 0.0
    %638 = vmatpush1.msra.mxu0 0.0
    %639 = vmatprep.subr.mxu0 0.0
    %640 = vmatpush1.msra.mxu0 0.0
    %641 = vmatprep.subr.mxu0 0.0
    %642 = vmatpush1.msra.mxu0 0.0
    %643 = vmatprep.subr.mxu0 0.0
    %644 = vmatpush1.msra.mxu0 0.0
    %645 = vmatprep.subr.mxu0 0.0
    %646 = vmatpush1.msra.mxu0 0.0
    %647 = vmatprep.subr.mxu0 0.0
    %648 = vmatpush1.msra.mxu0 0.0
    %649 = vmatprep.subr.mxu0 0.0
    %650 = vmatpush1.msra.mxu0 0.0
    %651 = vmatprep.subr.mxu0 0.0
    %652 = vmatpush1.msra.mxu0 0.0
    %653 = vmatprep.subr.mxu0 0.0
    %654 = vmatpush1.msra.mxu0 0.0
    %655 = vmatprep.subr.mxu0 0.0
    %656 = vmatpush1.msra.mxu0 0.0
    %657 = vmatprep.subr.mxu0 0.0
    %658 = vmatpush1.msra.mxu0 0.0
    %659 = vmatprep.subr.mxu0 0.0
    %660 = vmatpush1.msra.mxu0 0.0
    %661 = vmatprep.subr.mxu0 0.0
    %662 = vmatpush1.msra.mxu0 0.0
    %663 = vmatprep.subr.mxu0 0.0
    %664 = vmatpush1.msra.mxu0 0.0
    %665 = vmatprep.subr.mxu0 0.0
    %666 = vmatpush1.msra.mxu0 0.0
    %667 = vmatprep.subr.mxu0 0.0
    %668 = vmatpush1.msra.mxu0 0.0
    %669 = vmatprep.subr.mxu0 0.0
    %670 = vmatpush1.msra.mxu0 0.0
    %671 = vmatprep.subr.mxu0 0.0
    %672 = vmatpush1.msra.mxu0 0.0
    %673 = vmatprep.subr.mxu0 0.0
    %674 = vmatpush1.msra.mxu0 0.0
    %675 = vmatprep.subr.mxu0 0.0
    %676 = vmatpush1.msra.mxu0 0.0
    %677 = vmatprep.subr.mxu0 0.0
    %678 = vmatpush1.msra.mxu0 0.0
    %679 = vmatprep.subr.mxu0 0.0
    %680 = vmatpush1.msra.mxu0 0.0
    %681 = vmatprep.subr.mxu0 0.0
    %682 = vmatpush1.msra.mxu0 0.0
    %683 = vmatprep.subr.mxu0 0.0
    %684 = vmatpush1.msra.mxu0 0.0
    %685 = vmatprep.subr.mxu0 0.0
    %686 = vmatpush1.msra.mxu0 0.0
    %687 = vmatprep.mubr.f32.mxu0 0.0
    %688 = vmatmul.mubr.f32.gmra.mrb[0].mxu0 %v621
    %v689 = vpop.f32.mrb[0].mxu0
    %v690 = vadd.f32 0.0, %v689
    %v691 = vpop.f32.mrb[0].mxu0
    %692 = vdwg.mxu0
    %v694 = vrot.slane %v690, 4
    %v696 = vadd.f32 %v498, %v694
    %v697 = vxor.u32 %v696, 2147483648
    %v698 = vmul.f32 %v697, 1.442695
    %v699 = vpow.pop %v698
    %v700 = vadd.f32 %v699, 1.0
    %v701 = vrcp.pop %v700
    %v702 = vmul.f32 1.0, %v701
    %v703 = vtanh.pop %v696
    %v705 = vrot.slane %v611, 4
    %v707 = vmul.f32 %v702, %v705
    %709 = vrot.lane.b32.xlu0 %v703, 64
    %v710 = vpop.permute.xlu0 %709
    %v712 = vmul.f32 %v702, %v710
    %714 = vrot.lane.b32.xlu0 %v712, 32
    %v715 = vpop.permute.xlu0 %714
    %v717 = vadd.f32 %v707, %v715
    %v718 = vtanh.pop %v717
    %720 = vrot.lane.b32.xlu0 %v718, 64
    %v721 = vpop.permute.xlu0 %720
    %v723 = vmul.f32 %v702, %v721
    %v725 = vrot.slane %v723, 4
    %726 = vrot.lane.b32.xlu0 %v725, 32
    %v727 = vpop.permute.xlu0 %726
    %v728 = vsel %vm306, %v727, 0
    %730 = vmatprep.subr.mxu0 0.0
    %731 = vmatpush1.msra.mxu0 %v516
    %732 = vmatprep.subr.mxu0 0.0
    %733 = vmatpush1.msra.mxu0 %v517
    %734 = vmatprep.subr.mxu0 0.0
    %735 = vmatpush1.msra.mxu0 %v518
    %736 = vmatprep.subr.mxu0 0.0
    %737 = vmatpush1.msra.mxu0 %v519
    %738 = vmatprep.subr.mxu0 0.0
    %739 = vmatpush1.msra.mxu0 0.0
    %740 = vmatprep.subr.mxu0 0.0
    %741 = vmatpush1.msra.mxu0 0.0
    %742 = vmatprep.subr.mxu0 0.0
    %743 = vmatpush1.msra.mxu0 0.0
    %744 = vmatprep.subr.mxu0 0.0
    %745 = vmatpush1.msra.mxu0 0.0
    %746 = vmatprep.subr.mxu0 0.0
    %747 = vmatpush1.msra.mxu0 0.0
    %748 = vmatprep.subr.mxu0 0.0
    %749 = vmatpush1.msra.mxu0 0.0
    %750 = vmatprep.subr.mxu0 0.0
    %751 = vmatpush1.msra.mxu0 0.0
    %752 = vmatprep.subr.mxu0 0.0
    %753 = vmatpush1.msra.mxu0 0.0
    %754 = vmatprep.subr.mxu0 0.0
    %755 = vmatpush1.msra.mxu0 0.0
    %756 = vmatprep.subr.mxu0 0.0
    %757 = vmatpush1.msra.mxu0 0.0
    %758 = vmatprep.subr.mxu0 0.0
    %759 = vmatpush1.msra.mxu0 0.0
    %760 = vmatprep.subr.mxu0 0.0
    %761 = vmatpush1.msra.mxu0 0.0
    %762 = vmatprep.subr.mxu0 0.0
    %763 = vmatpush1.msra.mxu0 0.0
    %764 = vmatprep.subr.mxu0 0.0
    %765 = vmatpush1.msra.mxu0 0.0
    %766 = vmatprep.subr.mxu0 0.0
    %767 = vmatpush1.msra.mxu0 0.0
    %768 = vmatprep.subr.mxu0 0.0
    %769 = vmatpush1.msra.mxu0 0.0
    %770 = vmatprep.subr.mxu0 0.0
    %771 = vmatpush1.msra.mxu0 0.0
    %772 = vmatprep.subr.mxu0 0.0
    %773 = vmatpush1.msra.mxu0 0.0
    %774 = vmatprep.subr.mxu0 0.0
    %775 = vmatpush1.msra.mxu0 0.0
    %776 = vmatprep.subr.mxu0 0.0
    %777 = vmatpush1.msra.mxu0 0.0
    %778 = vmatprep.subr.mxu0 0.0
    %779 = vmatpush1.msra.mxu0 0.0
    %780 = vmatprep.subr.mxu0 0.0
    %781 = vmatpush1.msra.mxu0 0.0
    %782 = vmatprep.subr.mxu0 0.0
    %783 = vmatpush1.msra.mxu0 0.0
    %784 = vmatprep.subr.mxu0 0.0
    %785 = vmatpush1.msra.mxu0 0.0
    %786 = vmatprep.subr.mxu0 0.0
    %787 = vmatpush1.msra.mxu0 0.0
    %788 = vmatprep.subr.mxu0 0.0
    %789 = vmatpush1.msra.mxu0 0.0
    %790 = vmatprep.subr.mxu0 0.0
    %791 = vmatpush1.msra.mxu0 0.0
    %792 = vmatprep.subr.mxu0 0.0
    %793 = vmatpush1.msra.mxu0 0.0
    %794 = vmatprep.mubr.f32.mxu0 0.0
    %795 = vmatmul.mubr.f32.gmra.mrb[0].mxu0 %v728
    %v796 = vpop.f32.mrb[0].mxu0
    %v797 = vadd.f32 0.0, %v796
    %v798 = vpop.f32.mrb[0].mxu0
    %799 = vdwg.mxu0
    %v800 = vadd.f32 %v503, %v797
    %v801 = vxor.u32 %v800, 2147483648
    %v802 = vmul.f32 %v801, 1.442695
    %v803 = vpow.pop %v802
    %v804 = vadd.f32 %v803, 1.0
    %v805 = vrcp.pop %v804
    %v806 = vmul.f32 1.0, %v805
    %v807 = vtanh.pop %v800
    %v809 = vrot.slane %v717, 4
    %v811 = vmul.f32 %v806, %v809
    %813 = vrot.lane.b32.xlu0 %v807, 64
    %v814 = vpop.permute.xlu0 %813
    %v816 = vmul.f32 %v806, %v814
    %818 = vrot.lane.b32.xlu0 %v816, 32
    %v819 = vpop.permute.xlu0 %818
    %v821 = vadd.f32 %v811, %v819
    %v822 = vtanh.pop %v821
    %824 = vrot.lane.b32.xlu0 %v822, 64
    %v825 = vpop.permute.xlu0 %824
    %v827 = vmul.f32 %v806, %v825
    %829 = vrot.lane.b32.xlu0 %v827, 32
    %v830 = vpop.permute.xlu0 %829
    %v831 = vsel %vm306, %v830, 0
    %833 = vmatprep.subr.mxu0 0.0
    %834 = vmatpush1.msra.mxu0 %v516
    %835 = vmatprep.subr.mxu0 0.0
    %836 = vmatpush1.msra.mxu0 %v517
    %837 = vmatprep.subr.mxu0 0.0
    %838 = vmatpush1.msra.mxu0 %v518
    %839 = vmatprep.subr.mxu0 0.0
    %840 = vmatpush1.msra.mxu0 %v519
    %841 = vmatprep.subr.mxu0 0.0
    %842 = vmatpush1.msra.mxu0 0.0
    %843 = vmatprep.subr.mxu0 0.0
    %844 = vmatpush1.msra.mxu0 0.0
    %845 = vmatprep.subr.mxu0 0.0
    %846 = vmatpush1.msra.mxu0 0.0
    %847 = vmatprep.subr.mxu0 0.0
    %848 = vmatpush1.msra.mxu0 0.0
    %849 = vmatprep.subr.mxu0 0.0
    %850 = vmatpush1.msra.mxu0 0.0
    %851 = vmatprep.subr.mxu0 0.0
    %852 = vmatpush1.msra.mxu0 0.0
    %853 = vmatprep.subr.mxu0 0.0
    %854 = vmatpush1.msra.mxu0 0.0
    %855 = vmatprep.subr.mxu0 0.0
    %856 = vmatpush1.msra.mxu0 0.0
    %857 = vmatprep.subr.mxu0 0.0
    %858 = vmatpush1.msra.mxu0 0.0
    %859 = vmatprep.subr.mxu0 0.0
    %860 = vmatpush1.msra.mxu0 0.0
    %861 = vmatprep.subr.mxu0 0.0
    %862 = vmatpush1.msra.mxu0 0.0
    %863 = vmatprep.subr.mxu0 0.0
    %864 = vmatpush1.msra.mxu0 0.0
    %865 = vmatprep.subr.mxu0 0.0
    %866 = vmatpush1.msra.mxu0 0.0
    %867 = vmatprep.subr.mxu0 0.0
    %868 = vmatpush1.msra.mxu0 0.0
    %869 = vmatprep.subr.mxu0 0.0
    %870 = vmatpush1.msra.mxu0 0.0
    %871 = vmatprep.subr.mxu0 0.0
    %872 = vmatpush1.msra.mxu0 0.0
    %873 = vmatprep.subr.mxu0 0.0
    %874 = vmatpush1.msra.mxu0 0.0
    %875 = vmatprep.subr.mxu0 0.0
    %876 = vmatpush1.msra.mxu0 0.0
    %877 = vmatprep.subr.mxu0 0.0
    %878 = vmatpush1.msra.mxu0 0.0
    %879 = vmatprep.subr.mxu0 0.0
    %880 = vmatpush1.msra.mxu0 0.0
    %881 = vmatprep.subr.mxu0 0.0
    %882 = vmatpush1.msra.mxu0 0.0
    %883 = vmatprep.subr.mxu0 0.0
    %884 = vmatpush1.msra.mxu0 0.0
    %885 = vmatprep.subr.mxu0 0.0
    %886 = vmatpush1.msra.mxu0 0.0
    %887 = vmatprep.subr.mxu0 0.0
    %888 = vmatpush1.msra.mxu0 0.0
    %889 = vmatprep.subr.mxu0 0.0
    %890 = vmatpush1.msra.mxu0 0.0
    %891 = vmatprep.subr.mxu0 0.0
    %892 = vmatpush1.msra.mxu0 0.0
    %893 = vmatprep.subr.mxu0 0.0
    %894 = vmatpush1.msra.mxu0 0.0
    %895 = vmatprep.subr.mxu0 0.0
    %896 = vmatpush1.msra.mxu0 0.0
    %897 = vmatprep.mubr.f32.mxu0 0.0
    %898 = vmatmul.mubr.f32.gmra.mrb[0].mxu0 %v831
    %v899 = vpop.f32.mrb[0].mxu0
    %v900 = vadd.f32 0.0, %v899
    %v901 = vpop.f32.mrb[0].mxu0
    %902 = vdwg.mxu0
    %v904 = vrot.slane %v900, 4
    %v906 = vadd.f32 %v503, %v904
    %v907 = vxor.u32 %v906, 2147483648
    %v908 = vmul.f32 %v907, 1.442695
    %v909 = vpow.pop %v908
    %v910 = vadd.f32 %v909, 1.0
    %v911 = vrcp.pop %v910
    %v912 = vmul.f32 1.0, %v911
    %v913 = vtanh.pop %v906
    %v915 = vrot.slane %v821, 4
    %v917 = vmul.f32 %v912, %v915
    %919 = vrot.lane.b32.xlu0 %v913, 64
    %v920 = vpop.permute.xlu0 %919
    %v922 = vmul.f32 %v912, %v920
    %924 = vrot.lane.b32.xlu0 %v922, 32
    %v925 = vpop.permute.xlu0 %924
    %v927 = vadd.f32 %v917, %v925
    %v928 = vtanh.pop %v927
    %930 = vrot.lane.b32.xlu0 %v928, 64
    %v931 = vpop.permute.xlu0 %930
    %v933 = vmul.f32 %v912, %v931
    %v935 = vrot.slane %v933, 4
    %936 = vrot.lane.b32.xlu0 %v935, 32
    %v937 = vpop.permute.xlu0 %936
    %v938 = vsel %vm306, %v937, 0
    %940 = vmatprep.subr.mxu0 0.0
    %941 = vmatpush1.msra.mxu0 %v516
    %942 = vmatprep.subr.mxu0 0.0
    %943 = vmatpush1.msra.mxu0 %v517
    %944 = vmatprep.subr.mxu0 0.0
    %945 = vmatpush1.msra.mxu0 %v518
    %946 = vmatprep.subr.mxu0 0.0
    %947 = vmatpush1.msra.mxu0 %v519
    %948 = vmatprep.subr.mxu0 0.0
    %949 = vmatpush1.msra.mxu0 0.0
    %950 = vmatprep.subr.mxu0 0.0
    %951 = vmatpush1.msra.mxu0 0.0
    %952 = vmatprep.subr.mxu0 0.0
    %953 = vmatpush1.msra.mxu0 0.0
    %954 = vmatprep.subr.mxu0 0.0
    %955 = vmatpush1.msra.mxu0 0.0
    %956 = vmatprep.subr.mxu0 0.0
    %957 = vmatpush1.msra.mxu0 0.0
    %958 = vmatprep.subr.mxu0 0.0
    %959 = vmatpush1.msra.mxu0 0.0
    %960 = vmatprep.subr.mxu0 0.0
    %961 = vmatpush1.msra.mxu0 0.0
    %962 = vmatprep.subr.mxu0 0.0
    %963 = vmatpush1.msra.mxu0 0.0
    %964 = vmatprep.subr.mxu0 0.0
    %965 = vmatpush1.msra.mxu0 0.0
    %966 = vmatprep.subr.mxu0 0.0
    %967 = vmatpush1.msra.mxu0 0.0
    %968 = vmatprep.subr.mxu0 0.0
    %969 = vmatpush1.msra.mxu0 0.0
    %970 = vmatprep.subr.mxu0 0.0
    %971 = vmatpush1.msra.mxu0 0.0
    %972 = vmatprep.subr.mxu0 0.0
    %973 = vmatpush1.msra.mxu0 0.0
    %974 = vmatprep.subr.mxu0 0.0
    %975 = vmatpush1.msra.mxu0 0.0
    %976 = vmatprep.subr.mxu0 0.0
    %977 = vmatpush1.msra.mxu0 0.0
    %978 = vmatprep.subr.mxu0 0.0
    %979 = vmatpush1.msra.mxu0 0.0
    %980 = vmatprep.subr.mxu0 0.0
    %981 = vmatpush1.msra.mxu0 0.0
    %982 = vmatprep.subr.mxu0 0.0
    %983 = vmatpush1.msra.mxu0 0.0
    %984 = vmatprep.subr.mxu0 0.0
    %985 = vmatpush1.msra.mxu0 0.0
    %986 = vmatprep.subr.mxu0 0.0
    %987 = vmatpush1.msra.mxu0 0.0
    %988 = vmatprep.subr.mxu0 0.0
    %989 = vmatpush1.msra.mxu0 0.0
    %990 = vmatprep.subr.mxu0 0.0
    %991 = vmatpush1.msra.mxu0 0.0
    %992 = vmatprep.subr.mxu0 0.0
    %993 = vmatpush1.msra.mxu0 0.0
    %994 = vmatprep.subr.mxu0 0.0
    %995 = vmatpush1.msra.mxu0 0.0
    %996 = vmatprep.subr.mxu0 0.0
    %997 = vmatpush1.msra.mxu0 0.0
    %998 = vmatprep.subr.mxu0 0.0
    %999 = vmatpush1.msra.mxu0 0.0
    %1000 = vmatprep.subr.mxu0 0.0
    %1001 = vmatpush1.msra.mxu0 0.0
    %1002 = vmatprep.subr.mxu0 0.0
    %1003 = vmatpush1.msra.mxu0 0.0
    %1004 = vmatprep.mubr.f32.mxu0 0.0
    %1005 = vmatmul.mubr.f32.gmra.mrb[0].mxu0 %v938
    %v1006 = vpop.f32.mrb[0].mxu0
    %v1007 = vadd.f32 0.0, %v1006
    %v1008 = vpop.f32.mrb[0].mxu0
    %1009 = vdwg.mxu0
    %v1010 = vadd.f32 %v508, %v1007
    %v1011 = vxor.u32 %v1010, 2147483648
    %v1012 = vmul.f32 %v1011, 1.442695
    %v1013 = vpow.pop %v1012
    %v1014 = vadd.f32 %v1013, 1.0
    %v1015 = vrcp.pop %v1014
    %v1016 = vmul.f32 1.0, %v1015
    %v1017 = vtanh.pop %v1010
    %v1019 = vrot.slane %v927, 4
    %v1021 = vmul.f32 %v1016, %v1019
    %1023 = vrot.lane.b32.xlu0 %v1017, 64
    %v1024 = vpop.permute.xlu0 %1023
    %v1026 = vmul.f32 %v1016, %v1024
    %1028 = vrot.lane.b32.xlu0 %v1026, 32
    %v1029 = vpop.permute.xlu0 %1028
    %v1031 = vadd.f32 %v1021, %v1029
    %v1032 = vtanh.pop %v1031
    %1034 = vrot.lane.b32.xlu0 %v1032, 64
    %v1035 = vpop.permute.xlu0 %1034
    %v1037 = vmul.f32 %v1016, %v1035
    %1039 = vrot.lane.b32.xlu0 %v1037, 32
    %v1040 = vpop.permute.xlu0 %1039
    %v1041 = vsel %vm306, %v1040, 0
    %1043 = vmatprep.subr.mxu0 0.0
    %1044 = vmatpush1.msra.mxu0 %v516
    %1045 = vmatprep.subr.mxu0 0.0
    %1046 = vmatpush1.msra.mxu0 %v517
    %1047 = vmatprep.subr.mxu0 0.0
    %1048 = vmatpush1.msra.mxu0 %v518
    %1049 = vmatprep.subr.mxu0 0.0
    %1050 = vmatpush1.msra.mxu0 %v519
    %1051 = vmatprep.subr.mxu0 0.0
    %1052 = vmatpush1.msra.mxu0 0.0
    %1053 = vmatprep.subr.mxu0 0.0
    %1054 = vmatpush1.msra.mxu0 0.0
    %1055 = vmatprep.subr.mxu0 0.0
    %1056 = vmatpush1.msra.mxu0 0.0
    %1057 = vmatprep.subr.mxu0 0.0
    %1058 = vmatpush1.msra.mxu0 0.0
    %1059 = vmatprep.subr.mxu0 0.0
    %1060 = vmatpush1.msra.mxu0 0.0
    %1061 = vmatprep.subr.mxu0 0.0
    %1062 = vmatpush1.msra.mxu0 0.0
    %1063 = vmatprep.subr.mxu0 0.0
    %1064 = vmatpush1.msra.mxu0 0.0
    %1065 = vmatprep.subr.mxu0 0.0
    %1066 = vmatpush1.msra.mxu0 0.0
    %1067 = vmatprep.subr.mxu0 0.0
    %1068 = vmatpush1.msra.mxu0 0.0
    %1069 = vmatprep.subr.mxu0 0.0
    %1070 = vmatpush1.msra.mxu0 0.0
    %1071 = vmatprep.subr.mxu0 0.0
    %1072 = vmatpush1.msra.mxu0 0.0
    %1073 = vmatprep.subr.mxu0 0.0
    %1074 = vmatpush1.msra.mxu0 0.0
    %1075 = vmatprep.subr.mxu0 0.0
    %1076 = vmatpush1.msra.mxu0 0.0
    %1077 = vmatprep.subr.mxu0 0.0
    %1078 = vmatpush1.msra.mxu0 0.0
    %1079 = vmatprep.subr.mxu0 0.0
    %1080 = vmatpush1.msra.mxu0 0.0
    %1081 = vmatprep.subr.mxu0 0.0
    %1082 = vmatpush1.msra.mxu0 0.0
    %1083 = vmatprep.subr.mxu0 0.0
    %1084 = vmatpush1.msra.mxu0 0.0
    %1085 = vmatprep.subr.mxu0 0.0
    %1086 = vmatpush1.msra.mxu0 0.0
    %1087 = vmatprep.subr.mxu0 0.0
    %1088 = vmatpush1.msra.mxu0 0.0
    %1089 = vmatprep.subr.mxu0 0.0
    %1090 = vmatpush1.msra.mxu0 0.0
    %1091 = vmatprep.subr.mxu0 0.0
    %1092 = vmatpush1.msra.mxu0 0.0
    %1093 = vmatprep.subr.mxu0 0.0
    %1094 = vmatpush1.msra.mxu0 0.0
    %1095 = vmatprep.subr.mxu0 0.0
    %1096 = vmatpush1.msra.mxu0 0.0
    %1097 = vmatprep.subr.mxu0 0.0
    %1098 = vmatpush1.msra.mxu0 0.0
    %1099 = vmatprep.subr.mxu0 0.0
    %1100 = vmatpush1.msra.mxu0 0.0
    %1101 = vmatprep.subr.mxu0 0.0
    %1102 = vmatpush1.msra.mxu0 0.0
    %1103 = vmatprep.subr.mxu0 0.0
    %1104 = vmatpush1.msra.mxu0 0.0
    %1105 = vmatprep.subr.mxu0 0.0
    %1106 = vmatpush1.msra.mxu0 0.0
    %1107 = vmatprep.mubr.f32.mxu0 0.0
    %1108 = vmatmul.mubr.f32.gmra.mrb[0].mxu0 %v1041
    %v1109 = vpop.f32.mrb[0].mxu0
    %v1110 = vadd.f32 0.0, %v1109
    %v1111 = vpop.f32.mrb[0].mxu0
    %1112 = vdwg.mxu0
    %v1114 = vrot.slane %v1110, 4
    %v1116 = vadd.f32 %v508, %v1114
    %v1117 = vxor.u32 %v1116, 2147483648
    %v1118 = vmul.f32 %v1117, 1.442695
    %v1119 = vpow.pop %v1118
    %v1120 = vadd.f32 %v1119, 1.0
    %v1121 = vrcp.pop %v1120
    %v1122 = vmul.f32 1.0, %v1121
    %v1123 = vtanh.pop %v1116
    %v1125 = vrot.slane %v1031, 4
    %v1127 = vmul.f32 %v1122, %v1125
    %1129 = vrot.lane.b32.xlu0 %v1123, 64
    %v1130 = vpop.permute.xlu0 %1129
    %v1132 = vmul.f32 %v1122, %v1130
    %1134 = vrot.lane.b32.xlu0 %v1132, 32
    %v1135 = vpop.permute.xlu0 %1134
    %v1137 = vadd.f32 %v1127, %v1135
    %v1138 = vtanh.pop %v1137
    %1140 = vrot.lane.b32.xlu0 %v1138, 64
    %v1141 = vpop.permute.xlu0 %1140
    %v1143 = vmul.f32 %v1122, %v1141
    %v1145 = vrot.slane %v1143, 4
    %1146 = vrot.lane.b32.xlu0 %v1145, 32
    %v1147 = vpop.permute.xlu0 %1146
    %v1148 = vsel %vm306, %v1147, 0
    %1150 = vmatprep.subr.mxu0 0.0
    %1151 = vmatpush1.msra.mxu0 %v516
    %1152 = vmatprep.subr.mxu0 0.0
    %1153 = vmatpush1.msra.mxu0 %v517
    %1154 = vmatprep.subr.mxu0 0.0
    %1155 = vmatpush1.msra.mxu0 %v518
    %1156 = vmatprep.subr.mxu0 0.0
    %1157 = vmatpush1.msra.mxu0 %v519
    %1158 = vmatprep.subr.mxu0 0.0
    %1159 = vmatpush1.msra.mxu0 0.0
    %1160 = vmatprep.subr.mxu0 0.0
    %1161 = vmatpush1.msra.mxu0 0.0
    %1162 = vmatprep.subr.mxu0 0.0
    %1163 = vmatpush1.msra.mxu0 0.0
    %1164 = vmatprep.subr.mxu0 0.0
    %1165 = vmatpush1.msra.mxu0 0.0
    %1166 = vmatprep.subr.mxu0 0.0
    %1167 = vmatpush1.msra.mxu0 0.0
    %1168 = vmatprep.subr.mxu0 0.0
    %1169 = vmatpush1.msra.mxu0 0.0
    %1170 = vmatprep.subr.mxu0 0.0
    %1171 = vmatpush1.msra.mxu0 0.0
    %1172 = vmatprep.subr.mxu0 0.0
    %1173 = vmatpush1.msra.mxu0 0.0
    %1174 = vmatprep.subr.mxu0 0.0
    %1175 = vmatpush1.msra.mxu0 0.0
    %1176 = vmatprep.subr.mxu0 0.0
    %1177 = vmatpush1.msra.mxu0 0.0
    %1178 = vmatprep.subr.mxu0 0.0
    %1179 = vmatpush1.msra.mxu0 0.0
    %1180 = vmatprep.subr.mxu0 0.0
    %1181 = vmatpush1.msra.mxu0 0.0
    %1182 = vmatprep.subr.mxu0 0.0
    %1183 = vmatpush1.msra.mxu0 0.0
    %1184 = vmatprep.subr.mxu0 0.0
    %1185 = vmatpush1.msra.mxu0 0.0
    %1186 = vmatprep.subr.mxu0 0.0
    %1187 = vmatpush1.msra.mxu0 0.0
    %1188 = vmatprep.subr.mxu0 0.0
    %1189 = vmatpush1.msra.mxu0 0.0
    %1190 = vmatprep.subr.mxu0 0.0
    %1191 = vmatpush1.msra.mxu0 0.0
    %1192 = vmatprep.subr.mxu0 0.0
    %1193 = vmatpush1.msra.mxu0 0.0
    %1194 = vmatprep.subr.mxu0 0.0
    %1195 = vmatpush1.msra.mxu0 0.0
    %1196 = vmatprep.subr.mxu0 0.0
    %1197 = vmatpush1.msra.mxu0 0.0
    %1198 = vmatprep.subr.mxu0 0.0
    %1199 = vmatpush1.msra.mxu0 0.0
    %1200 = vmatprep.subr.mxu0 0.0
    %1201 = vmatpush1.msra.mxu0 0.0
    %1202 = vmatprep.subr.mxu0 0.0
    %1203 = vmatpush1.msra.mxu0 0.0
    %1204 = vmatprep.subr.mxu0 0.0
    %1205 = vmatpush1.msra.mxu0 0.0
    %1206 = vmatprep.subr.mxu0 0.0
    %1207 = vmatpush1.msra.mxu0 0.0
    %1208 = vmatprep.subr.mxu0 0.0
    %1209 = vmatpush1.msra.mxu0 0.0
    %1210 = vmatprep.subr.mxu0 0.0
    %1211 = vmatpush1.msra.mxu0 0.0
    %1212 = vmatprep.subr.mxu0 0.0
    %1213 = vmatpush1.msra.mxu0 0.0
    %1214 = vmatprep.mubr.f32.mxu0 0.0
    %1215 = vmatmul.mubr.f32.gmra.mrb[0].mxu0 %v1148
    %v1216 = vpop.f32.mrb[0].mxu0
    %v1217 = vadd.f32 0.0, %v1216
    %v1218 = vpop.f32.mrb[0].mxu0
    %1219 = vdwg.mxu0
    %v1220 = vadd.f32 %v513, %v1217
    %v1221 = vxor.u32 %v1220, 2147483648
    %v1222 = vmul.f32 %v1221, 1.442695
    %v1223 = vpow.pop %v1222
    %v1224 = vadd.f32 %v1223, 1.0
    %v1225 = vrcp.pop %v1224
    %v1226 = vmul.f32 1.0, %v1225
    %v1227 = vtanh.pop %v1220
    %v1229 = vrot.slane %v1137, 4
    %v1231 = vmul.f32 %v1226, %v1229
    %1233 = vrot.lane.b32.xlu0 %v1227, 64
    %v1234 = vpop.permute.xlu0 %1233
    %v1236 = vmul.f32 %v1226, %v1234
    %1238 = vrot.lane.b32.xlu0 %v1236, 32
    %v1239 = vpop.permute.xlu0 %1238
    %v1241 = vadd.f32 %v1231, %v1239
    %v1242 = vtanh.pop %v1241
    %1244 = vrot.lane.b32.xlu0 %v1242, 64
    %v1245 = vpop.permute.xlu0 %1244
    %v1247 = vmul.f32 %v1226, %v1245
    %1249 = vrot.lane.b32.xlu0 %v1247, 32
    %v1250 = vpop.permute.xlu0 %1249
    %v1251 = vsel %vm306, %v1250, 0
    %1253 = vmatprep.subr.mxu0 0.0
    %1254 = vmatpush1.msra.mxu0 %v516
    %1255 = vmatprep.subr.mxu0 0.0
    %1256 = vmatpush1.msra.mxu0 %v517
    %1257 = vmatprep.subr.mxu0 0.0
    %1258 = vmatpush1.msra.mxu0 %v518
    %1259 = vmatprep.subr.mxu0 0.0
    %1260 = vmatpush1.msra.mxu0 %v519
    %1261 = vmatprep.subr.mxu0 0.0
    %1262 = vmatpush1.msra.mxu0 0.0
    %1263 = vmatprep.subr.mxu0 0.0
    %1264 = vmatpush1.msra.mxu0 0.0
    %1265 = vmatprep.subr.mxu0 0.0
    %1266 = vmatpush1.msra.mxu0 0.0
    %1267 = vmatprep.subr.mxu0 0.0
    %1268 = vmatpush1.msra.mxu0 0.0
    %1269 = vmatprep.subr.mxu0 0.0
    %1270 = vmatpush1.msra.mxu0 0.0
    %1271 = vmatprep.subr.mxu0 0.0
    %1272 = vmatpush1.msra.mxu0 0.0
    %1273 = vmatprep.subr.mxu0 0.0
    %1274 = vmatpush1.msra.mxu0 0.0
    %1275 = vmatprep.subr.mxu0 0.0
    %1276 = vmatpush1.msra.mxu0 0.0
    %1277 = vmatprep.subr.mxu0 0.0
    %1278 = vmatpush1.msra.mxu0 0.0
    %1279 = vmatprep.subr.mxu0 0.0
    %1280 = vmatpush1.msra.mxu0 0.0
    %1281 = vmatprep.subr.mxu0 0.0
    %1282 = vmatpush1.msra.mxu0 0.0
    %1283 = vmatprep.subr.mxu0 0.0
    %1284 = vmatpush1.msra.mxu0 0.0
    %1285 = vmatprep.subr.mxu0 0.0
    %1286 = vmatpush1.msra.mxu0 0.0
    %1287 = vmatprep.subr.mxu0 0.0
    %1288 = vmatpush1.msra.mxu0 0.0
    %1289 = vmatprep.subr.mxu0 0.0
    %1290 = vmatpush1.msra.mxu0 0.0
    %1291 = vmatprep.subr.mxu0 0.0
    %1292 = vmatpush1.msra.mxu0 0.0
    %1293 = vmatprep.subr.mxu0 0.0
    %1294 = vmatpush1.msra.mxu0 0.0
    %1295 = vmatprep.subr.mxu0 0.0
    %1296 = vmatpush1.msra.mxu0 0.0
    %1297 = vmatprep.subr.mxu0 0.0
    %1298 = vmatpush1.msra.mxu0 0.0
    %1299 = vmatprep.subr.mxu0 0.0
    %1300 = vmatpush1.msra.mxu0 0.0
    %1301 = vmatprep.subr.mxu0 0.0
    %1302 = vmatpush1.msra.mxu0 0.0
    %1303 = vmatprep.subr.mxu0 0.0
    %1304 = vmatpush1.msra.mxu0 0.0
    %1305 = vmatprep.subr.mxu0 0.0
    %1306 = vmatpush1.msra.mxu0 0.0
    %1307 = vmatprep.subr.mxu0 0.0
    %1308 = vmatpush1.msra.mxu0 0.0
    %1309 = vmatprep.subr.mxu0 0.0
    %1310 = vmatpush1.msra.mxu0 0.0
    %1311 = vmatprep.subr.mxu0 0.0
    %1312 = vmatpush1.msra.mxu0 0.0
    %1313 = vmatprep.subr.mxu0 0.0
    %1314 = vmatpush1.msra.mxu0 0.0
    %1315 = vmatprep.subr.mxu0 0.0
    %1316 = vmatpush1.msra.mxu0 0.0
    %1317 = vmatprep.mubr.f32.mxu0 0.0
    %1318 = vmatmul.mubr.f32.gmra.mrb[0].mxu0 %v1251
    %v1319 = vpop.f32.mrb[0].mxu0
    %v1320 = vadd.f32 0.0, %v1319
    %v1321 = vpop.f32.mrb[0].mxu0
    %1322 = vdwg.mxu0
    %v1324 = vrot.slane %v1320, 4
    %v1326 = vadd.f32 %v513, %v1324
    %v1327 = vxor.u32 %v1326, 2147483648
    %v1328 = vmul.f32 %v1327, 1.442695
    %v1329 = vpow.pop %v1328
    %v1330 = vadd.f32 %v1329, 1.0
    %v1331 = vrcp.pop %v1330
    %v1332 = vmul.f32 1.0, %v1331
    %v1333 = vtanh.pop %v1326
    %v1335 = vrot.slane %v1241, 4
    %v1337 = vmul.f32 %v1332, %v1335
    %1339 = vrot.lane.b32.xlu0 %v1333, 64
    %v1340 = vpop.permute.xlu0 %1339
    %v1342 = vmul.f32 %v1332, %v1340
    %1344 = vrot.lane.b32.xlu0 %v1342, 32
    %v1345 = vpop.permute.xlu0 %1344
    %v1347 = vadd.f32 %v1337, %v1345
    %v1348 = vtanh.pop %v1347
    %1350 = vrot.lane.b32.xlu0 %v1348, 64
    %v1351 = vpop.permute.xlu0 %1350
    %v1353 = vmul.f32 %v1332, %v1351
    %1355 = vrot.lane.b32.xlu0 %v1353, 32
    %v1356 = vpop.permute.xlu0 %1355
    %v1358 = vrot.slane %v1353, 2
    %1359 = vrot.lane.b32.xlu0 %v1358, 64
    %v1360 = vpop.permute.xlu0 %1359
    %v1362 = vsel %vm306, %v1356, %v1360
    %v1363 = vld [vmem:[%s7] sm:$0xff]
    %v1364 = vld [vmem:[%s7 + $0x8] sm:$0xff]
    %v1365 = vld [vmem:[%s7 + $0x10] sm:$0xff]
    %v1366 = vld [vmem:[%s7 + $0x18] sm:$0xff]
    %v1367 = vld [vmem:[%s7 + $0x20] sm:$0xff]
    %v1368 = vld [vmem:[%s7 + $0x28] sm:$0xff]
    %v1369 = vld [vmem:[%s7 + $0x30] sm:$0xff]
    %v1370 = vld [vmem:[%s7 + $0x38] sm:$0xff]
    %v1371 = vld [vmem:[#allocation10] sm:$0x1]
    %v1373 = vlaneseq
    %v1374 = vshrl.u32 %v1373, 7
    %v1375 = vsub.s32 0, %v1374
    %v1376 = vrot.slane %v1371, %v1375
    %v1379 = vrot.slane %v1362, 4
    %vm1380 = vcmask 523264
    %v1381 = vsel %vm1380, %v1379, 0
    %1383 = vmatprep.subr.mxu0 0.0
    %1384 = vmatpush1.msra.mxu0 %v1363
    %1385 = vmatprep.subr.mxu0 0.0
    %1386 = vmatpush1.msra.mxu0 %v1364
    %1387 = vmatprep.subr.mxu0 0.0
    %1388 = vmatpush1.msra.mxu0 %v1365
    %1389 = vmatprep.subr.mxu0 0.0
    %1390 = vmatpush1.msra.mxu0 %v1366
    %1391 = vmatprep.subr.mxu0 0.0
    %1392 = vmatpush1.msra.mxu0 %v1367
    %1393 = vmatprep.subr.mxu0 0.0
    %1394 = vmatpush1.msra.mxu0 %v1368
    %1395 = vmatprep.subr.mxu0 0.0
    %1396 = vmatpush1.msra.mxu0 %v1369
    %1397 = vmatprep.subr.mxu0 0.0
    %1398 = vmatpush1.msra.mxu0 %v1370
    %1399 = vmatprep.subr.mxu0 0.0
    %1400 = vmatpush1.msra.mxu0 0.0
    %1401 = vmatprep.subr.mxu0 0.0
    %1402 = vmatpush1.msra.mxu0 0.0
    %1403 = vmatprep.subr.mxu0 0.0
    %1404 = vmatpush1.msra.mxu0 0.0
    %1405 = vmatprep.subr.mxu0 0.0
    %1406 = vmatpush1.msra.mxu0 0.0
    %1407 = vmatprep.subr.mxu0 0.0
    %1408 = vmatpush1.msra.mxu0 0.0
    %1409 = vmatprep.subr.mxu0 0.0
    %1410 = vmatpush1.msra.mxu0 0.0
    %1411 = vmatprep.subr.mxu0 0.0
    %1412 = vmatpush1.msra.mxu0 0.0
    %1413 = vmatprep.subr.mxu0 0.0
    %1414 = vmatpush1.msra.mxu0 0.0
    %1415 = vmatprep.subr.mxu0 0.0
    %1416 = vmatpush1.msra.mxu0 0.0
    %1417 = vmatprep.subr.mxu0 0.0
    %1418 = vmatpush1.msra.mxu0 0.0
    %1419 = vmatprep.subr.mxu0 0.0
    %1420 = vmatpush1.msra.mxu0 0.0
    %1421 = vmatprep.subr.mxu0 0.0
    %1422 = vmatpush1.msra.mxu0 0.0
    %1423 = vmatprep.subr.mxu0 0.0
    %1424 = vmatpush1.msra.mxu0 0.0
    %1425 = vmatprep.subr.mxu0 0.0
    %1426 = vmatpush1.msra.mxu0 0.0
    %1427 = vmatprep.subr.mxu0 0.0
    %1428 = vmatpush1.msra.mxu0 0.0
    %1429 = vmatprep.subr.mxu0 0.0
    %1430 = vmatpush1.msra.mxu0 0.0
    %1431 = vmatprep.subr.mxu0 0.0
    %1432 = vmatpush1.msra.mxu0 0.0
    %1433 = vmatprep.subr.mxu0 0.0
    %1434 = vmatpush1.msra.mxu0 0.0
    %1435 = vmatprep.subr.mxu0 0.0
    %1436 = vmatpush1.msra.mxu0 0.0
    %1437 = vmatprep.subr.mxu0 0.0
    %1438 = vmatpush1.msra.mxu0 0.0
    %1439 = vmatprep.subr.mxu0 0.0
    %1440 = vmatpush1.msra.mxu0 0.0
    %1441 = vmatprep.subr.mxu0 0.0
    %1442 = vmatpush1.msra.mxu0 0.0
    %1443 = vmatprep.subr.mxu0 0.0
    %1444 = vmatpush1.msra.mxu0 0.0
    %1445 = vmatprep.subr.mxu0 0.0
    %1446 = vmatpush1.msra.mxu0 0.0
    %1447 = vmatprep.mubr.f32.mxu0 0.0
    %1448 = vmatmul.mubr.f32.gmra.mrb[0].mxu0 %v1381
    %v1449 = vpop.f32.mrb[0].mxu0
    %v1450 = vadd.f32 %v1376, %v1449
    %v1451 = vpop.f32.mrb[0].mxu0
    %1452 = vdwg.mxu0
    %v1453 = vmax.f32 %v1450, 0.0
    %v1454 = vld [vmem:[%s9] sm:$0xff]
    %v1455 = vld [vmem:[%s9 + $0x8] sm:$0xff]
    %v1456 = vld [vmem:[%s9 + $0x10] sm:$0xff]
    %v1457 = vld [vmem:[%s9 + $0x18] sm:$0xff]
    %v1458 = vld [vmem:[%s9 + $0x20] sm:$0xff]
    %v1459 = vld [vmem:[%s9 + $0x28] sm:$0xff]
    %v1460 = vld [vmem:[%s9 + $0x30] sm:$0xff]
    %v1461 = vld [vmem:[%s9 + $0x38] sm:$0xff]
    %v1462 = vld [vmem:[#allocation11] sm:$0x1]
    %v1464 = vlaneseq
    %v1465 = vshrl.u32 %v1464, 7
    %v1466 = vsub.s32 0, %v1465
    %v1467 = vrot.slane %v1462, %v1466
    %v1470 = vsel %vm1380, %v1453, 0
    %1472 = vmatprep.subr.mxu0 0.0
    %1473 = vmatpush1.msra.mxu0 %v1454
    %1474 = vmatprep.subr.mxu0 0.0
    %1475 = vmatpush1.msra.mxu0 %v1455
    %1476 = vmatprep.subr.mxu0 0.0
    %1477 = vmatpush1.msra.mxu0 %v1456
    %1478 = vmatprep.subr.mxu0 0.0
    %1479 = vmatpush1.msra.mxu0 %v1457
    %1480 = vmatprep.subr.mxu0 0.0
    %1481 = vmatpush1.msra.mxu0 %v1458
    %1482 = vmatprep.subr.mxu0 0.0
    %1483 = vmatpush1.msra.mxu0 %v1459
    %1484 = vmatprep.subr.mxu0 0.0
    %1485 = vmatpush1.msra.mxu0 %v1460
    %1486 = vmatprep.subr.mxu0 0.0
    %1487 = vmatpush1.msra.mxu0 %v1461
    %1488 = vmatprep.subr.mxu0 0.0
    %1489 = vmatpush1.msra.mxu0 0.0
    %1490 = vmatprep.subr.mxu0 0.0
    %1491 = vmatpush1.msra.mxu0 0.0
    %1492 = vmatprep.subr.mxu0 0.0
    %1493 = vmatpush1.msra.mxu0 0.0
    %1494 = vmatprep.subr.mxu0 0.0
    %1495 = vmatpush1.msra.mxu0 0.0
    %1496 = vmatprep.subr.mxu0 0.0
    %1497 = vmatpush1.msra.mxu0 0.0
    %1498 = vmatprep.subr.mxu0 0.0
    %1499 = vmatpush1.msra.mxu0 0.0
    %1500 = vmatprep.subr.mxu0 0.0
    %1501 = vmatpush1.msra.mxu0 0.0
    %1502 = vmatprep.subr.mxu0 0.0
    %1503 = vmatpush1.msra.mxu0 0.0
    %1504 = vmatprep.subr.mxu0 0.0
    %1505 = vmatpush1.msra.mxu0 0.0
    %1506 = vmatprep.subr.mxu0 0.0
    %1507 = vmatpush1.msra.mxu0 0.0
    %1508 = vmatprep.subr.mxu0 0.0
    %1509 = vmatpush1.msra.mxu0 0.0
    %1510 = vmatprep.subr.mxu0 0.0
    %1511 = vmatpush1.msra.mxu0 0.0
    %1512 = vmatprep.subr.mxu0 0.0
    %1513 = vmatpush1.msra.mxu0 0.0
    %1514 = vmatprep.subr.mxu0 0.0
    %1515 = vmatpush1.msra.mxu0 0.0
    %1516 = vmatprep.subr.mxu0 0.0
    %1517 = vmatpush1.msra.mxu0 0.0
    %1518 = vmatprep.subr.mxu0 0.0
    %1519 = vmatpush1.msra.mxu0 0.0
    %1520 = vmatprep.subr.mxu0 0.0
    %1521 = vmatpush1.msra.mxu0 0.0
    %1522 = vmatprep.subr.mxu0 0.0
    %1523 = vmatpush1.msra.mxu0 0.0
    %1524 = vmatprep.subr.mxu0 0.0
    %1525 = vmatpush1.msra.mxu0 0.0
    %1526 = vmatprep.subr.mxu0 0.0
    %1527 = vmatpush1.msra.mxu0 0.0
    %1528 = vmatprep.subr.mxu0 0.0
    %1529 = vmatpush1.msra.mxu0 0.0
    %1530 = vmatprep.subr.mxu0 0.0
    %1531 = vmatpush1.msra.mxu0 0.0
    %1532 = vmatprep.subr.mxu0 0.0
    %1533 = vmatpush1.msra.mxu0 0.0
    %1534 = vmatprep.subr.mxu0 0.0
    %1535 = vmatpush1.msra.mxu0 0.0
    %1536 = vmatprep.mubr.f32.mxu0 0.0
    %1537 = vmatmul.mubr.f32.gmra.mrb[0].mxu0 %v1470
    %v1538 = vpop.f32.mrb[0].mxu0
    %v1539 = vadd.f32 %v1467, %v1538
    %v1540 = vpop.f32.mrb[0].mxu0
    %1541 = vdwg.mxu0
    %v1542 = vmax.f32 %v1539, 0.0
    %v1543 = vld [vmem:[%s11] sm:$0xff]
    %v1544 = vld [vmem:[%s11 + $0x8] sm:$0xff]
    %v1545 = vld [vmem:[%s11 + $0x10] sm:$0xff]
    %v1546 = vld [vmem:[%s11 + $0x18] sm:$0xff]
    %v1547 = vld [vmem:[%s11 + $0x20] sm:$0xff]
    %v1548 = vld [vmem:[%s11 + $0x28] sm:$0xff]
    %v1549 = vld [vmem:[%s11 + $0x30] sm:$0xff]
    %v1550 = vld [vmem:[%s11 + $0x38] sm:$0xff]
    %v1551 = vld [vmem:[#allocation13] sm:$0x1]
    %v1553 = vlaneseq
    %v1554 = vshrl.u32 %v1553, 7
    %v1555 = vsub.s32 0, %v1554
    %v1556 = vrot.slane %v1551, %v1555
    %v1559 = vsel %vm1380, %v1542, 0
    %1561 = vmatprep.subr.mxu0 0.0
    %1562 = vmatpush1.msra.mxu0 %v1543
    %1563 = vmatprep.subr.mxu0 0.0
    %1564 = vmatpush1.msra.mxu0 %v1544
    %1565 = vmatprep.subr.mxu0 0.0
    %1566 = vmatpush1.msra.mxu0 %v1545
    %1567 = vmatprep.subr.mxu0 0.0
    %1568 = vmatpush1.msra.mxu0 %v1546
    %1569 = vmatprep.subr.mxu0 0.0
    %1570 = vmatpush1.msra.mxu0 %v1547
    %1571 = vmatprep.subr.mxu0 0.0
    %1572 = vmatpush1.msra.mxu0 %v1548
    %1573 = vmatprep.subr.mxu0 0.0
    %1574 = vmatpush1.msra.mxu0 %v1549
    %1575 = vmatprep.subr.mxu0 0.0
    %1576 = vmatpush1.msra.mxu0 %v1550
    %1577 = vmatprep.subr.mxu0 0.0
    %1578 = vmatpush1.msra.mxu0 0.0
    %1579 = vmatprep.subr.mxu0 0.0
    %1580 = vmatpush1.msra.mxu0 0.0
    %1581 = vmatprep.subr.mxu0 0.0
    %1582 = vmatpush1.msra.mxu0 0.0
    %1583 = vmatprep.subr.mxu0 0.0
    %1584 = vmatpush1.msra.mxu0 0.0
    %1585 = vmatprep.subr.mxu0 0.0
    %1586 = vmatpush1.msra.mxu0 0.0
    %1587 = vmatprep.subr.mxu0 0.0
    %1588 = vmatpush1.msra.mxu0 0.0
    %1589 = vmatprep.subr.mxu0 0.0
    %1590 = vmatpush1.msra.mxu0 0.0
    %1591 = vmatprep.subr.mxu0 0.0
    %1592 = vmatpush1.msra.mxu0 0.0
    %1593 = vmatprep.subr.mxu0 0.0
    %1594 = vmatpush1.msra.mxu0 0.0
    %1595 = vmatprep.subr.mxu0 0.0
    %1596 = vmatpush1.msra.mxu0 0.0
    %1597 = vmatprep.subr.mxu0 0.0
    %1598 = vmatpush1.msra.mxu0 0.0
    %1599 = vmatprep.subr.mxu0 0.0
    %1600 = vmatpush1.msra.mxu0 0.0
    %1601 = vmatprep.subr.mxu0 0.0
    %1602 = vmatpush1.msra.mxu0 0.0
    %1603 = vmatprep.subr.mxu0 0.0
    %1604 = vmatpush1.msra.mxu0 0.0
    %1605 = vmatprep.subr.mxu0 0.0
    %1606 = vmatpush1.msra.mxu0 0.0
    %1607 = vmatprep.subr.mxu0 0.0
    %1608 = vmatpush1.msra.mxu0 0.0
    %1609 = vmatprep.subr.mxu0 0.0
    %1610 = vmatpush1.msra.mxu0 0.0
    %1611 = vmatprep.subr.mxu0 0.0
    %1612 = vmatpush1.msra.mxu0 0.0
    %1613 = vmatprep.subr.mxu0 0.0
    %1614 = vmatpush1.msra.mxu0 0.0
    %1615 = vmatprep.subr.mxu0 0.0
    %1616 = vmatpush1.msra.mxu0 0.0
    %1617 = vmatprep.subr.mxu0 0.0
    %1618 = vmatpush1.msra.mxu0 0.0
    %1619 = vmatprep.subr.mxu0 0.0
    %1620 = vmatpush1.msra.mxu0 0.0
    %1621 = vmatprep.subr.mxu0 0.0
    %1622 = vmatpush1.msra.mxu0 0.0
    %1623 = vmatprep.subr.mxu0 0.0
    %1624 = vmatpush1.msra.mxu0 0.0
    %1625 = vmatprep.mubr.f32.mxu0 0.0
    %1626 = vmatmul.mubr.f32.gmra.mrb[0].mxu0 %v1559
    %v1627 = vpop.f32.mrb[0].mxu0
    %v1628 = vadd.f32 %v1556, %v1627
    %v1629 = vpop.f32.mrb[0].mxu0
    %1630 = vdwg.mxu0
    %v1631 = vmax.f32 %v1628, 0.0
    %v1632 = vld [vmem:[%s13] sm:$0xff]
    %v1633 = vld [vmem:[%s13 + $0x8] sm:$0xff]
    %v1634 = vld [vmem:[%s13 + $0x10] sm:$0xff]
    %v1635 = vld [vmem:[%s13 + $0x18] sm:$0xff]
    %v1636 = vld [vmem:[%s13 + $0x20] sm:$0xff]
    %v1637 = vld [vmem:[%s13 + $0x28] sm:$0xff]
    %v1638 = vld [vmem:[%s13 + $0x30] sm:$0xff]
    %v1639 = vld [vmem:[%s13 + $0x38] sm:$0xff]
    %v1640 = vld [vmem:[#allocation14] sm:$0x1]
    %v1642 = vlaneseq
    %v1643 = vshrl.u32 %v1642, 7
    %v1644 = vsub.s32 0, %v1643
    %v1645 = vrot.slane %v1640, %v1644
    %v1648 = vsel %vm1380, %v1631, 0
    %1650 = vmatprep.subr.mxu0 0.0
    %1651 = vmatpush1.msra.mxu0 %v1632
    %1652 = vmatprep.subr.mxu0 0.0
    %1653 = vmatpush1.msra.mxu0 %v1633
    %1654 = vmatprep.subr.mxu0 0.0
    %1655 = vmatpush1.msra.mxu0 %v1634
    %1656 = vmatprep.subr.mxu0 0.0
    %1657 = vmatpush1.msra.mxu0 %v1635
    %1658 = vmatprep.subr.mxu0 0.0
    %1659 = vmatpush1.msra.mxu0 %v1636
    %1660 = vmatprep.subr.mxu0 0.0
    %1661 = vmatpush1.msra.mxu0 %v1637
    %1662 = vmatprep.subr.mxu0 0.0
    %1663 = vmatpush1.msra.mxu0 %v1638
    %1664 = vmatprep.subr.mxu0 0.0
    %1665 = vmatpush1.msra.mxu0 %v1639
    %1666 = vmatprep.subr.mxu0 0.0
    %1667 = vmatpush1.msra.mxu0 0.0
    %1668 = vmatprep.subr.mxu0 0.0
    %1669 = vmatpush1.msra.mxu0 0.0
    %1670 = vmatprep.subr.mxu0 0.0
    %1671 = vmatpush1.msra.mxu0 0.0
    %1672 = vmatprep.subr.mxu0 0.0
    %1673 = vmatpush1.msra.mxu0 0.0
    %1674 = vmatprep.subr.mxu0 0.0
    %1675 = vmatpush1.msra.mxu0 0.0
    %1676 = vmatprep.subr.mxu0 0.0
    %1677 = vmatpush1.msra.mxu0 0.0
    %1678 = vmatprep.subr.mxu0 0.0
    %1679 = vmatpush1.msra.mxu0 0.0
    %1680 = vmatprep.subr.mxu0 0.0
    %1681 = vmatpush1.msra.mxu0 0.0
    %1682 = vmatprep.subr.mxu0 0.0
    %1683 = vmatpush1.msra.mxu0 0.0
    %1684 = vmatprep.subr.mxu0 0.0
    %1685 = vmatpush1.msra.mxu0 0.0
    %1686 = vmatprep.subr.mxu0 0.0
    %1687 = vmatpush1.msra.mxu0 0.0
    %1688 = vmatprep.subr.mxu0 0.0
    %1689 = vmatpush1.msra.mxu0 0.0
    %1690 = vmatprep.subr.mxu0 0.0
    %1691 = vmatpush1.msra.mxu0 0.0
    %1692 = vmatprep.subr.mxu0 0.0
    %1693 = vmatpush1.msra.mxu0 0.0
    %1694 = vmatprep.subr.mxu0 0.0
    %1695 = vmatpush1.msra.mxu0 0.0
    %1696 = vmatprep.subr.mxu0 0.0
    %1697 = vmatpush1.msra.mxu0 0.0
    %1698 = vmatprep.subr.mxu0 0.0
    %1699 = vmatpush1.msra.mxu0 0.0
    %1700 = vmatprep.subr.mxu0 0.0
    %1701 = vmatpush1.msra.mxu0 0.0
    %1702 = vmatprep.subr.mxu0 0.0
    %1703 = vmatpush1.msra.mxu0 0.0
    %1704 = vmatprep.subr.mxu0 0.0
    %1705 = vmatpush1.msra.mxu0 0.0
    %1706 = vmatprep.subr.mxu0 0.0
    %1707 = vmatpush1.msra.mxu0 0.0
    %1708 = vmatprep.subr.mxu0 0.0
    %1709 = vmatpush1.msra.mxu0 0.0
    %1710 = vmatprep.subr.mxu0 0.0
    %1711 = vmatpush1.msra.mxu0 0.0
    %1712 = vmatprep.subr.mxu0 0.0
    %1713 = vmatpush1.msra.mxu0 0.0
    %1714 = vmatprep.mubr.f32.mxu0 0.0
    %1715 = vmatmul.mubr.f32.gmra.mrb[0].mxu0 %v1648
    %v1716 = vpop.f32.mrb[0].mxu0
    %v1717 = vadd.f32 %v1645, %v1716
    %v1718 = vpop.f32.mrb[0].mxu0
    %1719 = vdwg.mxu0
    %1720 = vst [vmem:[#allocation16] sm:$0x3] %v1717
    // Predicated region
    $region94: #{snli_forward.1} parent=1 // pred_check
      _
    $region95: #{snli_forward.1} parent=1 // pred_check_branch
      %1722 = sbr.rel (0) target = $region97
    $region96: #{snli_forward.1} parent=1 // pred_region
      %s1724 = ssub.s32 32, 32
      %1725 = vsyncadd [#allocation4], %s1724
      %s1727 = sshll.u32 [#allocation16], 4
      %s1728 = int_to_ptr.vmem [resolvable:$true] %s1727
      %1730 = dma.vmem_to_hbm [thread:$0]  %s1728, 32, %s15, [#allocation4]
    $region97: #{snli_forward.1} parent=1 // pred_fallthru
      _
    // Predicated region
    $region98: #{snli_forward.1} parent=1 // pred_check
      _
    $region99: #{snli_forward.1} parent=1 // pred_check_branch
      %1732 = sbr.rel (0) target = $region101
    $region100: #{snli_forward.1} parent=1 // pred_region
      %1733 = dma.done [#allocation4], 32
    $region101: #{snli_forward.1} parent=1 // pred_fallthru
      _
    %1734 = vsyncpa [#allocation3], 1
    %1735 = vsyncpa [#allocation6], 1
    %1736 = vsyncpa [#allocation9], 1
    %1737 = vsyncpa [#allocation12], 1
    %1738 = vsyncpa [#allocation15], 1
    %1739 = vsyncpa [#allocation4], 1

</llo_original>
